<compile_context>
chip_gen: v7x
topology: tpu7x:2x2x1
jax: 0.10.0
libtpu: 0.0.40
codegen_flags: <defaults>
</compile_context>

<pallas_src>
import functools
from collections import namedtuple

import jax
import jax.numpy as jnp
from jax import lax
from jax.experimental import pallas as pl
from jax.experimental.pallas import tpu as pltpu

# ----------------------------- config ---------------------------------------
B = 2            # batch
C = 4            # image channels
IMG = 16         # image H = W
PATCH = 8        # patch size
L = 8            # text sequence length
VOCAB = 100
HIDDEN = 32      # encoder hidden size
EMBED = 16       # projection embedding dim
QUEUE = 64       # queue size (divisible by batch)
TEMP = 0.07
MOMENTUM = 0.995

NP = (IMG // PATCH) ** 2          # patches per image (4)
PD = C * PATCH * PATCH            # patch feature dim (256)
SIM_PAD = 128                     # lane-dense similarity width (>= B + QUEUE)
assert B + QUEUE <= SIM_PAD

ALBEFOutput = namedtuple(
    "ALBEFOutput",
    ["image_embeddings", "image_embeddings_m", "text_embeddings",
     "text_atts", "vl_embeddings", "similarity"],
    defaults=(None,) * 6,
)
ALBEFSimilarity = namedtuple(
    "ALBEFSimilarity",
    ["sim_i2t", "sim_t2i", "sim_i2t_m", "sim_t2i_m"],
    defaults=(None,) * 4,
)


def _vmem():
    return pl.BlockSpec(memory_space=pltpu.MemorySpace.VMEM)


def _smem():
    return pl.BlockSpec(memory_space=pltpu.MemorySpace.SMEM)


# ----------------------------- fused kernel A --------------------------------
# encoders (online + momentum) -> projections -> normalize -> enqueue -> sims

def _albef_fused_kernel(ptr_ref, patch_ref, temb_ref, vw_ref, vb_ref, cls_ref,
                        tw_ref, tb_ref, pw_ref, pb_ref, iq_ref, tq_ref,
                        img_out_ref, txt_out_ref, sim_out_ref,
                        iq_out_ref, tq_out_ref):
    H, E = HIDDEN, EMBED
    inv_temp = jnp.float32(1.0 / TEMP)

    # ---- vision encoder: patches @ [Wv | Wv_m]  (bf16 operands, f32 accum) ----
    tok = jnp.dot(patch_ref[...], vw_ref[...],
                  preferred_element_type=jnp.float32) + vb_ref[...]        # (B*NP, 2H)
    cls_v = cls_ref[...]                                                   # (1, 2H)
    for b in range(B):                                                     # static unroll
        base = b * (1 + NP)
        img_out_ref[base:base + 1, :] = cls_v
        img_out_ref[base + 1:base + 1 + NP, :] = tok[b * NP:(b + 1) * NP, :]

    # ---- text encoder: [online emb; momentum emb] @ [Wt | Wt_m] ----
    ttok = jnp.dot(temb_ref[...], tw_ref[...],
                   preferred_element_type=jnp.float32) + tb_ref[...]       # (2BL, 2H)
    txt_out_ref[...] = ttok[:B * L, :H]                                    # online tokens

    # ---- CLS pooling feeding the four projection heads ----
    img_cls = jnp.broadcast_to(cls_v[:, :H], (B, H))
    img_cls_m = jnp.broadcast_to(cls_v[:, H:], (B, H))
    txt_cls = jnp.concatenate(
        [ttok[b * L:b * L + 1, :H] for b in range(B)], axis=0)
    txt_cls_m = jnp.concatenate(
        [ttok[B * L + b * L:B * L + b * L + 1, H:] for b in range(B)], axis=0)
    xcls = jnp.concatenate([img_cls, img_cls_m, txt_cls, txt_cls_m], axis=0)  # (4B, H)

    # ---- projections: one dot against [Wvp | Wvp_m | Wtp | Wtp_m], then
    #      F.normalize (eps = 1e-12, like PyTorch) ----
    proj = jnp.dot(xcls, pw_ref[...],
                   preferred_element_type=jnp.float32) + pb_ref[...]       # (4B, 4E)
    raw = jnp.concatenate([proj[0:B, 0:E],
                           proj[B:2 * B, E:2 * E],
                           proj[2 * B:3 * B, 2 * E:3 * E],
                           proj[3 * B:4 * B, 3 * E:4 * E]], axis=0)        # (4B, E)
    nrm = jnp.sqrt(jnp.sum(raw * raw, axis=-1, keepdims=True))
    feats = raw / jnp.maximum(nrm, 1e-12)
    image_feat_m = feats[B:2 * B]
    text_feat_m = feats[3 * B:4 * B]

    # ---- _dequeue_and_enqueue (queue stored as (QUEUE, EMBED) rows).
    #      Matches reference ordering: enqueue happens BEFORE similarity. ----
    ptr = ptr_ref[0]
    row = lax.broadcasted_iota(jnp.int32, (QUEUE, E), 0)
    new_iq = iq_ref[...]
    new_tq = tq_ref[...]
    for b in range(B):                                                     # static unroll
        new_iq = jnp.where(row == ptr + b, image_feat_m[b:b + 1, :], new_iq)
        new_tq = jnp.where(row == ptr + b, text_feat_m[b:b + 1, :], new_tq)
    iq_out_ref[...] = new_iq
    tq_out_ref[...] = new_tq

    # ---- similarity as one lane-dense (4B, 128) slab.
    #      rows 0:B=sim_i2t, B:2B=sim_i2t_m, 2B:3B=sim_t2i, 3B:4B=sim_t2i_m ----
    pad = jnp.zeros((SIM_PAD - B - QUEUE, E), jnp.float32)
    text_all = jnp.concatenate([text_feat_m, new_tq, pad], axis=0)         # (128, E)
    image_all = jnp.concatenate([image_feat_m, new_iq, pad], axis=0)       # (128, E)
    dn = (((1,), (1,)), ((), ()))   # a @ b.T without materializing a transpose
    sim_t = lax.dot_general(feats[0:2 * B], text_all, dn,
                            preferred_element_type=jnp.float32)            # (2B, 128)
    sim_i = lax.dot_general(feats[2 * B:4 * B], image_all, dn,
                            preferred_element_type=jnp.float32)            # (2B, 128)
    sim_out_ref[...] = jnp.concatenate([sim_t, sim_i], axis=0) * inv_temp


# ----------------------------- fused kernel B --------------------------------
# multimodal encoder over the 3B (pos + neg) rows, masked pool folded in.

def _mm_fused_kernel(img_ref, txt_ref, att_ref, w_ref, b_ref, o_ref):
    t = txt_ref[...]                                   # (3B, L, H)
    a = att_ref[...]                                   # (3B, L, 1)
    s = jnp.sum(t * a, axis=1)                         # (3B, H)
    d = jnp.sum(a, axis=1)                             # (3B, 1)
    pool = s / jnp.maximum(d, 1.0)                     # masked mean over sequence
    fused = jnp.concatenate([img_ref[...], pool], axis=-1)      # (3B, 2H)
    o_ref[...] = jnp.dot(fused, w_ref[...],
                         preferred_element_type=jnp.float32) + b_ref[...]


# ----------------------------- ALBEF forward ---------------------------------

def albef_forward(params, params_m, image_queue, text_queue, queue_ptr,
                  image, text, text_atts, sample_key):
    # _momentum_update: param_m = m * param_m + (1 - m) * param
    params_m = jax.tree_util.tree_map(
        lambda pm, p: MOMENTUM * pm + (1.0 - MOMENTUM) * p, params_m, params)

    Bn = image.shape[0]

    # patchify once (hoisted; shared by online and momentum branches)
    patches = image.reshape(Bn, C, IMG // PATCH, PATCH, IMG // PATCH, PATCH)
    patches = patches.transpose(0, 2, 4, 1, 3, 5).reshape(Bn * NP, PD)
    patches = patches.astype(jnp.bfloat16)

    # text embedding gather (online + momentum tables), stacked along rows
    temb = jnp.take(params["text"]["emb"], text, axis=0).reshape(Bn * L, HIDDEN)
    temb_m = jnp.take(params_m["text"]["emb"], text, axis=0).reshape(Bn * L, HIDDEN)
    temb_cat = jnp.concatenate([temb, temb_m], axis=0).astype(jnp.bfloat16)

    # concatenate online/momentum weights along N for wider single matmuls
    vw = jnp.concatenate([params["vision"]["w"], params_m["vision"]["w"]],
                         axis=1).astype(jnp.bfloat16)
    vb = jnp.concatenate([params["vision"]["b"], params_m["vision"]["b"]])[None, :]
    cls_cat = jnp.concatenate([params["vision"]["cls"].reshape(1, HIDDEN),
                               params_m["vision"]["cls"].reshape(1, HIDDEN)], axis=1)
    tw = jnp.concatenate([params["text"]["w"], params_m["text"]["w"]],
                         axis=1).astype(jnp.bfloat16)
    tb = jnp.concatenate([params["text"]["b"], params_m["text"]["b"]])[None, :]
    pw = jnp.concatenate([params["vision_proj"]["w"], params_m["vision_proj"]["w"],
                          params["text_proj"]["w"], params_m["text_proj"]["w"]], axis=1)
    pb = jnp.concatenate([params["vision_proj"]["b"], params_m["vision_proj"]["b"],
                          params["text_proj"]["b"], params_m["text_proj"]["b"]])[None, :]

    ptr_arr = jnp.asarray(queue_ptr, jnp.int32).reshape((1,))

    img_cat2d, txt2d, sim_out, new_iq, new_tq = pl.pallas_call(
        _albef_fused_kernel,
        out_shape=(
            jax.ShapeDtypeStruct((Bn * (1 + NP), 2 * HIDDEN), jnp.float32),
            jax.ShapeDtypeStruct((Bn * L, HIDDEN), jnp.float32),
            jax.ShapeDtypeStruct((4 * Bn, SIM_PAD), jnp.float32),
            jax.ShapeDtypeStruct((QUEUE, EMBED), jnp.float32),
            jax.ShapeDtypeStruct((QUEUE, EMBED), jnp.float32),
        ),
        in_specs=[_smem()] + [_vmem()] * 11,
        out_specs=(_vmem(),) * 5,
        input_output_aliases={10: 3, 11: 4},   # queues updated in place
    )(ptr_arr, patches, temb_cat, vw, vb, cls_cat, tw, tb, pw, pb,
      image_queue, text_queue)

    # unpack the packed [online | momentum] embedding slabs
    img3 = img_cat2d.reshape(Bn, 1 + NP, 2 * HIDDEN)
    image_embeds = img3[..., :HIDDEN]
    image_embeds_m = img3[..., HIDDEN:]
    text_embeds = txt2d.reshape(Bn, L, HIDDEN)

    nvalid = Bn + QUEUE
    sim_i2t = sim_out[0:Bn, :nvalid]
    sim_i2t_m = sim_out[Bn:2 * Bn, :nvalid]
    sim_t2i = sim_out[2 * Bn:3 * Bn, :nvalid]
    sim_t2i_m = sim_out[3 * Bn:4 * Bn, :nvalid]
    similarity = ALBEFSimilarity(sim_i2t, sim_t2i, sim_i2t_m, sim_t2i_m)

    new_ptr = (queue_ptr + Bn) % QUEUE

    # _neg_embeddings: multinomial(softmax(sim) w/ zero diag) == categorical
    # over the same logits with the diagonal masked to -inf.
    # TODO(synk): torch.multinomial uses torch's global RNG; draws here come
    # from a JAX key (same distribution, different stream).
    diag = jnp.eye(Bn, dtype=bool)
    logits_i2t = jnp.where(diag, -jnp.inf, sim_i2t[:, :Bn])
    logits_t2i = jnp.where(diag, -jnp.inf, sim_t2i[:, :Bn])
    k1, k2 = jax.random.split(sample_key)
    neg_idx_img = jax.random.categorical(k1, logits_t2i, axis=-1)
    neg_idx_txt = jax.random.categorical(k2, logits_i2t, axis=-1)
    image_embeds_neg = jnp.take(image_embeds, neg_idx_img, axis=0)
    text_embeds_neg = jnp.take(text_embeds, neg_idx_txt, axis=0)
    text_atts_neg = jnp.take(text_atts, neg_idx_txt, axis=0)

    # _multimodal_embeddings: pos + neg batches fused into one 3B-row kernel.
    # rows 0:B  -> (image, text)        == output_pos
    # rows B:2B -> (image_neg, text)    == output_neg[:B]
    # rows 2B:  -> (image, text_neg)    == output_neg[B:]
    img_cls3 = jnp.concatenate([image_embeds[:, 0, :],
                                image_embeds_neg[:, 0, :],
                                image_embeds[:, 0, :]], axis=0)
    txt3 = jnp.concatenate([text_embeds, text_embeds, text_embeds_neg], axis=0)
    atts3 = jnp.concatenate([text_atts, text_atts, text_atts_neg],
                            axis=0).astype(jnp.float32)[:, :, None]
    vl_embeddings = pl.pallas_call(
        _mm_fused_kernel,
        out_shape=jax.ShapeDtypeStruct((3 * Bn, HIDDEN), jnp.float32),
        in_specs=[_vmem()] * 5,
        out_specs=_vmem(),
    )(img_cls3, txt3, atts3, params["mm"]["w"], params["mm"]["b"][None, :])

    out = ALBEFOutput(
        image_embeddings=image_embeds,
        image_embeddings_m=image_embeds_m,
        text_embeddings=text_embeds,
        text_atts=text_atts,
        vl_embeddings=vl_embeddings,
        similarity=similarity,
    )
    return out, (params_m, new_iq, new_tq, new_ptr)


# ----------------------------- param init ------------------------------------

def init_params(key):
    ks = jax.random.split(key, 10)
    params = {
        "vision": {
            "w": 0.02 * jax.random.normal(ks[0], (PD, HIDDEN), jnp.float32),
            "b": jnp.zeros((HIDDEN,), jnp.float32),
            "cls": 0.02 * jax.random.normal(ks[1], (1, 1, HIDDEN), jnp.float32),
        },
        "text": {
            "emb": 0.02 * jax.random.normal(ks[2], (VOCAB, HIDDEN), jnp.float32),
            "w": 0.02 * jax.random.normal(ks[3], (HIDDEN, HIDDEN), jnp.float32),
            "b": jnp.zeros((HIDDEN,), jnp.float32),
        },
        "mm": {
            "w": 0.02 * jax.random.normal(ks[4], (2 * HIDDEN, HIDDEN), jnp.float32),
            "b": jnp.zeros((HIDDEN,), jnp.float32),
        },
        "vision_proj": {
            "w": 0.02 * jax.random.normal(ks[5], (HIDDEN, EMBED), jnp.float32),
            "b": jnp.zeros((EMBED,), jnp.float32),
        },
        "text_proj": {
            "w": 0.02 * jax.random.normal(ks[6], (HIDDEN, EMBED), jnp.float32),
            "b": jnp.zeros((EMBED,), jnp.float32),
        },
    }
    # momentum models are exact copies (as in _copy_params_momentum_models)
    params_m = jax.tree_util.tree_map(lambda x: x, params)
    # queues: randn then L2-normalize; stored as (QUEUE, EMBED) rows, which is
    # the transpose of the reference (embed_dim, queue_size) buffer layout.
    iq = jax.random.normal(ks[7], (QUEUE, EMBED), jnp.float32)
    tq = jax.random.normal(ks[8], (QUEUE, EMBED), jnp.float32)
    iq = iq / jnp.maximum(jnp.sqrt(jnp.sum(iq * iq, axis=1, keepdims=True)), 1e-12)
    tq = tq / jnp.maximum(jnp.sqrt(jnp.sum(tq * tq, axis=1, keepdims=True)), 1e-12)
    return params, params_m, iq, tq


# ----------------------------- main -------------------------------------------

if __name__ == "__main__":
    key = jax.random.PRNGKey(0)
    k_param, k_img, k_txt, k_samp = jax.random.split(key, 4)

    params, params_m, image_queue, text_queue = init_params(k_param)

    image = jax.random.normal(k_img, (B, C, IMG, IMG), jnp.float32)      # NCHW
    text = jax.random.randint(k_txt, (B, L), 0, VOCAB, dtype=jnp.int32)
    text_atts = jnp.array([[1] * L, [1] * (L - 2) + [0] * 2], dtype=jnp.int32)

    fwd = jax.jit(albef_forward)
    out, (new_params_m, new_iq, new_tq, new_ptr) = fwd(
        params, params_m, image_queue, text_queue, jnp.int32(0),
        image, text, text_atts, k_samp)

    jax.block_until_ready(out.vl_embeddings)
    jax.block_until_ready(out.similarity.sim_i2t)
    jax.block_until_ready(new_iq)

    assert out.image_embeddings.shape == (B, 1 + NP, HIDDEN)
    assert out.image_embeddings_m.shape == (B, 1 + NP, HIDDEN)
    assert out.text_embeddings.shape == (B, L, HIDDEN)
    assert out.similarity.sim_i2t.shape == (B, B + QUEUE)
    assert out.similarity.sim_t2i_m.shape == (B, B + QUEUE)
    assert out.vl_embeddings.shape == (3 * B, HIDDEN)
    assert new_iq.shape == (QUEUE, EMBED) and new_tq.shape == (QUEUE, EMBED)

    print("KERNEL_OK")
</pallas_src>

<mosaic_0001>
module attributes {stable_mosaic.version = 11 : i64} {
  func.func @_albef_fused_kernel(%arg0: memref<1xi32, #tpu.memory_space<smem>>, %arg1: memref<8x256xbf16, #tpu.memory_space<vmem>>, %arg2: memref<32x32xbf16, #tpu.memory_space<vmem>>, %arg3: memref<256x64xbf16, #tpu.memory_space<vmem>>, %arg4: memref<1x64xf32, #tpu.memory_space<vmem>>, %arg5: memref<1x64xf32, #tpu.memory_space<vmem>>, %arg6: memref<32x64xbf16, #tpu.memory_space<vmem>>, %arg7: memref<1x64xf32, #tpu.memory_space<vmem>>, %arg8: memref<32x64xf32, #tpu.memory_space<vmem>>, %arg9: memref<1x64xf32, #tpu.memory_space<vmem>>, %arg10: memref<64x16xf32, #tpu.memory_space<vmem>>, %arg11: memref<64x16xf32, #tpu.memory_space<vmem>>, %arg12: memref<10x64xf32, #tpu.memory_space<vmem>>, %arg13: memref<16x32xf32, #tpu.memory_space<vmem>>, %arg14: memref<8x128xf32, #tpu.memory_space<vmem>>, %arg15: memref<64x16xf32, #tpu.memory_space<vmem>>, %arg16: memref<64x16xf32, #tpu.memory_space<vmem>>) attributes {dimension_semantics = [], scalar_prefetch = 0 : i64, scratch_operands = 0 : i64, tpu.core_type = #tpu.core_type<tc>} {
    %c0 = arith.constant 0 : index
    %c0_0 = arith.constant 0 : index
    %0 = vector.load %arg1[%c0, %c0_0] : memref<8x256xbf16, #tpu.memory_space<vmem>>, vector<8x256xbf16>
    %c0_1 = arith.constant 0 : index
    %c0_2 = arith.constant 0 : index
    %1 = vector.load %arg3[%c0_1, %c0_2] : memref<256x64xbf16, #tpu.memory_space<vmem>>, vector<256x64xbf16>
    %cst = arith.constant dense<0.000000e+00> : vector<8x64xf32>
    %2 = tpu.matmul %0, %1, %cst {dimension_numbers = #tpu.dot_dimension_numbers<[1], [0], [0], [1], [0, 0, 1, 1], [], []>} : vector<8x256xbf16>, vector<256x64xbf16>, vector<8x64xf32> -> vector<8x64xf32>
    %c0_3 = arith.constant 0 : index
    %c0_4 = arith.constant 0 : index
    %3 = vector.load %arg4[%c0_3, %c0_4] : memref<1x64xf32, #tpu.memory_space<vmem>>, vector<1x64xf32>
    %4 = vector.broadcast %3 : vector<1x64xf32> to vector<8x64xf32>
    %5 = arith.addf %2, %4 : vector<8x64xf32>
    %c0_5 = arith.constant 0 : index
    %c0_6 = arith.constant 0 : index
    %6 = vector.load %arg5[%c0_5, %c0_6] : memref<1x64xf32, #tpu.memory_space<vmem>>, vector<1x64xf32>
    %c0_7 = arith.constant 0 : index
    %c0_8 = arith.constant 0 : index
    %7 = vector.load %arg12[%c0_7, %c0_8] : memref<10x64xf32, #tpu.memory_space<vmem>>, vector<1x64xf32>
    tpu.vector_store %arg12[%c0_7, %c0_8], %6 {strides = array<i32>} : memref<10x64xf32, #tpu.memory_space<vmem>>, vector<1x64xf32>,
    %8 = vector.extract_strided_slice %5 {offsets = [0, 0], sizes = [4, 64], strides = [1, 1]} : vector<8x64xf32> to vector<4x64xf32>
    %c1 = arith.constant 1 : index
    %c0_9 = arith.constant 0 : index
    %9 = vector.load %arg12[%c1, %c0_9] : memref<10x64xf32, #tpu.memory_space<vmem>>, vector<4x64xf32>
    tpu.vector_store %arg12[%c1, %c0_9], %8 {strides = array<i32>} : memref<10x64xf32, #tpu.memory_space<vmem>>, vector<4x64xf32>,
    %c5 = arith.constant 5 : index
    %c0_10 = arith.constant 0 : index
    %10 = vector.load %arg12[%c5, %c0_10] : memref<10x64xf32, #tpu.memory_space<vmem>>, vector<1x64xf32>
    tpu.vector_store %arg12[%c5, %c0_10], %6 {strides = array<i32>} : memref<10x64xf32, #tpu.memory_space<vmem>>, vector<1x64xf32>,
    %11 = vector.extract_strided_slice %5 {offsets = [4, 0], sizes = [4, 64], strides = [1, 1]} : vector<8x64xf32> to vector<4x64xf32>
    %c6 = arith.constant 6 : index
    %c0_11 = arith.constant 0 : index
    %12 = vector.load %arg12[%c6, %c0_11] : memref<10x64xf32, #tpu.memory_space<vmem>>, vector<4x64xf32>
    tpu.vector_store %arg12[%c6, %c0_11], %11 {strides = array<i32>} : memref<10x64xf32, #tpu.memory_space<vmem>>, vector<4x64xf32>,
    %c0_12 = arith.constant 0 : index
    %c0_13 = arith.constant 0 : index
    %13 = vector.load %arg2[%c0_12, %c0_13] : memref<32x32xbf16, #tpu.memory_space<vmem>>, vector<32x32xbf16>
    %c0_14 = arith.constant 0 : index
    %c0_15 = arith.constant 0 : index
    %14 = vector.load %arg6[%c0_14, %c0_15] : memref<32x64xbf16, #tpu.memory_space<vmem>>, vector<32x64xbf16>
    %cst_16 = arith.constant dense<0.000000e+00> : vector<32x64xf32>
    %15 = tpu.matmul %13, %14, %cst_16 {dimension_numbers = #tpu.dot_dimension_numbers<[1], [0], [0], [1], [0, 0, 1, 1], [], []>} : vector<32x32xbf16>, vector<32x64xbf16>, vector<32x64xf32> -> vector<32x64xf32>
    %c0_17 = arith.constant 0 : index
    %c0_18 = arith.constant 0 : index
    %16 = vector.load %arg7[%c0_17, %c0_18] : memref<1x64xf32, #tpu.memory_space<vmem>>, vector<1x64xf32>
    %17 = vector.broadcast %16 : vector<1x64xf32> to vector<32x64xf32>
    %18 = arith.addf %15, %17 : vector<32x64xf32>
    %19 = vector.extract_strided_slice %18 {offsets = [0, 0], sizes = [16, 32], strides = [1, 1]} : vector<32x64xf32> to vector<16x32xf32>
    %c0_19 = arith.constant 0 : index
    %c0_20 = arith.constant 0 : index
    %20 = vector.load %arg13[%c0_19, %c0_20] : memref<16x32xf32, #tpu.memory_space<vmem>>, vector<16x32xf32>
    tpu.vector_store %arg13[%c0_19, %c0_20], %19 {strides = array<i32>} : memref<16x32xf32, #tpu.memory_space<vmem>>, vector<16x32xf32>,
    %21 = vector.extract_strided_slice %6 {offsets = [0, 0], sizes = [1, 32], strides = [1, 1]} : vector<1x64xf32> to vector<1x32xf32>
    %22 = vector.shape_cast %21 : vector<1x32xf32> to vector<1x32xf32>
    %23 = vector.broadcast %22 : vector<1x32xf32> to vector<2x32xf32>
    %24 = vector.extract_strided_slice %6 {offsets = [0, 32], sizes = [1, 32], strides = [1, 1]} : vector<1x64xf32> to vector<1x32xf32>
    %25 = vector.shape_cast %24 : vector<1x32xf32> to vector<1x32xf32>
    %26 = vector.broadcast %25 : vector<1x32xf32> to vector<2x32xf32>
    %27 = vector.extract_strided_slice %18 {offsets = [0, 0], sizes = [1, 32], strides = [1, 1]} : vector<32x64xf32> to vector<1x32xf32>
    %28 = vector.extract_strided_slice %18 {offsets = [8, 0], sizes = [1, 32], strides = [1, 1]} : vector<32x64xf32> to vector<1x32xf32>
    %29 = tpu.concatenate %27, %28 in 0 : vector<1x32xf32>, vector<1x32xf32> -> vector<2x32xf32>
    %30 = vector.extract_strided_slice %18 {offsets = [16, 32], sizes = [1, 32], strides = [1, 1]} : vector<32x64xf32> to vector<1x32xf32>
    %31 = vector.extract_strided_slice %18 {offsets = [24, 32], sizes = [1, 32], strides = [1, 1]} : vector<32x64xf32> to vector<1x32xf32>
    %32 = tpu.concatenate %30, %31 in 0 : vector<1x32xf32>, vector<1x32xf32> -> vector<2x32xf32>
    %33 = tpu.concatenate %23, %26, %29, %32 in 0 : vector<2x32xf32>, vector<2x32xf32>, vector<2x32xf32>, vector<2x32xf32> -> vector<8x32xf32>
    %c0_21 = arith.constant 0 : index
    %c0_22 = arith.constant 0 : index
    %34 = vector.load %arg8[%c0_21, %c0_22] : memref<32x64xf32, #tpu.memory_space<vmem>>, vector<32x64xf32>
    %cst_23 = arith.constant dense<0.000000e+00> : vector<8x64xf32>
    %35 = tpu.matmul %33, %34, %cst_23 {dimension_numbers = #tpu.dot_dimension_numbers<[1], [0], [0], [1], [0, 0, 1, 1], [], []>} : vector<8x32xf32>, vector<32x64xf32>, vector<8x64xf32> -> vector<8x64xf32>
    %c0_24 = arith.constant 0 : index
    %c0_25 = arith.constant 0 : index
    %36 = vector.load %arg9[%c0_24, %c0_25] : memref<1x64xf32, #tpu.memory_space<vmem>>, vector<1x64xf32>
    %37 = vector.broadcast %36 : vector<1x64xf32> to vector<8x64xf32>
    %38 = arith.addf %35, %37 : vector<8x64xf32>
    %39 = vector.extract_strided_slice %38 {offsets = [0, 0], sizes = [2, 16], strides = [1, 1]} : vector<8x64xf32> to vector<2x16xf32>
    %40 = vector.extract_strided_slice %38 {offsets = [2, 16], sizes = [2, 16], strides = [1, 1]} : vector<8x64xf32> to vector<2x16xf32>
    %41 = vector.extract_strided_slice %38 {offsets = [4, 32], sizes = [2, 16], strides = [1, 1]} : vector<8x64xf32> to vector<2x16xf32>
    %42 = vector.extract_strided_slice %38 {offsets = [6, 48], sizes = [2, 16], strides = [1, 1]} : vector<8x64xf32> to vector<2x16xf32>
    %43 = tpu.concatenate %39, %40, %41, %42 in 0 : vector<2x16xf32>, vector<2x16xf32>, vector<2x16xf32>, vector<2x16xf32> -> vector<8x16xf32>
    %44 = arith.mulf %43, %43 : vector<8x16xf32>
    %cst_26 = arith.constant dense<0.000000e+00> : vector<8xf32>
    %45 = vector.multi_reduction <add>, %44, %cst_26 [1] : vector<8x16xf32> to vector<8xf32>
    %46 = vector.shape_cast %45 : vector<8xf32> to vector<8x1xf32>
    %47 = math.sqrt %46 : vector<8x1xf32>
    %cst_27 = arith.constant 9.99999996E-13 : f32
    %48 = vector.broadcast %cst_27 : f32 to vector<8x1xf32>
    %49 = arith.maximumf %47, %48 : vector<8x1xf32>
    %50 = vector.broadcast %49 : vector<8x1xf32> to vector<8x16xf32>
    %51 = arith.divf %43, %50 : vector<8x16xf32>
    %52 = vector.extract_strided_slice %51 {offsets = [2, 0], sizes = [2, 16], strides = [1, 1]} : vector<8x16xf32> to vector<2x16xf32>
    %53 = vector.extract_strided_slice %51 {offsets = [6, 0], sizes = [2, 16], strides = [1, 1]} : vector<8x16xf32> to vector<2x16xf32>
    %c0_28 = arith.constant 0 : index
    %54 = memref.load %arg0[%c0_28] : memref<1xi32, #tpu.memory_space<smem>>
    %55 = tpu.iota {dimensions = array<i32: 0>} : vector<64x16xi32>
    %c0_29 = arith.constant 0 : index
    %c0_30 = arith.constant 0 : index
    %56 = vector.load %arg10[%c0_29, %c0_30] : memref<64x16xf32, #tpu.memory_space<vmem>>, vector<64x16xf32>
    %c0_31 = arith.constant 0 : index
    %c0_32 = arith.constant 0 : index
    %57 = vector.load %arg11[%c0_31, %c0_32] : memref<64x16xf32, #tpu.memory_space<vmem>>, vector<64x16xf32>
    %c0_i32 = arith.constant 0 : i32
    %58 = arith.addi %54, %c0_i32 : i32
    %59 = vector.broadcast %58 : i32 to vector<64x16xi32>
    %60 = arith.cmpi eq, %55, %59 : vector<64x16xi32>
    %61 = vector.extract_strided_slice %52 {offsets = [0, 0], sizes = [1, 16], strides = [1, 1]} : vector<2x16xf32> to vector<1x16xf32>
    %62 = vector.shape_cast %61 : vector<1x16xf32> to vector<1x16xf32>
    %63 = vector.broadcast %62 : vector<1x16xf32> to vector<64x16xf32>
    %64 = arith.select %60, %63, %56 : vector<64x16xi1>, vector<64x16xf32>
    %c0_i32_33 = arith.constant 0 : i32
    %65 = arith.addi %54, %c0_i32_33 : i32
    %66 = vector.broadcast %65 : i32 to vector<64x16xi32>
    %67 = arith.cmpi eq, %55, %66 : vector<64x16xi32>
    %68 = vector.extract_strided_slice %53 {offsets = [0, 0], sizes = [1, 16], strides = [1, 1]} : vector<2x16xf32> to vector<1x16xf32>
    %69 = vector.shape_cast %68 : vector<1x16xf32> to vector<1x16xf32>
    %70 = vector.broadcast %69 : vector<1x16xf32> to vector<64x16xf32>
    %71 = arith.select %67, %70, %57 : vector<64x16xi1>, vector<64x16xf32>
    %c1_i32 = arith.constant 1 : i32
    %72 = arith.addi %54, %c1_i32 : i32
    %73 = vector.broadcast %72 : i32 to vector<64x16xi32>
    %74 = arith.cmpi eq, %55, %73 : vector<64x16xi32>
    %75 = vector.extract_strided_slice %52 {offsets = [1, 0], sizes = [1, 16], strides = [1, 1]} : vector<2x16xf32> to vector<1x16xf32>
    %76 = vector.shape_cast %75 : vector<1x16xf32> to vector<1x16xf32>
    %77 = vector.broadcast %76 : vector<1x16xf32> to vector<64x16xf32>
    %78 = arith.select %74, %77, %64 : vector<64x16xi1>, vector<64x16xf32>
    %c1_i32_34 = arith.constant 1 : i32
    %79 = arith.addi %54, %c1_i32_34 : i32
    %80 = vector.broadcast %79 : i32 to vector<64x16xi32>
    %81 = arith.cmpi eq, %55, %80 : vector<64x16xi32>
    %82 = vector.extract_strided_slice %53 {offsets = [1, 0], sizes = [1, 16], strides = [1, 1]} : vector<2x16xf32> to vector<1x16xf32>
    %83 = vector.shape_cast %82 : vector<1x16xf32> to vector<1x16xf32>
    %84 = vector.broadcast %83 : vector<1x16xf32> to vector<64x16xf32>
    %85 = arith.select %81, %84, %71 : vector<64x16xi1>, vector<64x16xf32>
    %c0_35 = arith.constant 0 : index
    %c0_36 = arith.constant 0 : index
    %86 = vector.load %arg15[%c0_35, %c0_36] : memref<64x16xf32, #tpu.memory_space<vmem>>, vector<64x16xf32>
    tpu.vector_store %arg15[%c0_35, %c0_36], %78 {strides = array<i32>} : memref<64x16xf32, #tpu.memory_space<vmem>>, vector<64x16xf32>,
    %c0_37 = arith.constant 0 : index
    %c0_38 = arith.constant 0 : index
    %87 = vector.load %arg16[%c0_37, %c0_38] : memref<64x16xf32, #tpu.memory_space<vmem>>, vector<64x16xf32>
    tpu.vector_store %arg16[%c0_37, %c0_38], %85 {strides = array<i32>} : memref<64x16xf32, #tpu.memory_space<vmem>>, vector<64x16xf32>,
    %cst_39 = arith.constant 0.000000e+00 : f32
    %88 = vector.broadcast %cst_39 : f32 to vector<62x16xf32>
    %89 = tpu.concatenate %53, %85, %88 in 0 : vector<2x16xf32>, vector<64x16xf32>, vector<62x16xf32> -> vector<128x16xf32>
    %90 = tpu.concatenate %52, %78, %88 in 0 : vector<2x16xf32>, vector<64x16xf32>, vector<62x16xf32> -> vector<128x16xf32>
    %91 = vector.extract_strided_slice %51 {offsets = [0, 0], sizes = [4, 16], strides = [1, 1]} : vector<8x16xf32> to vector<4x16xf32>
    %cst_40 = arith.constant dense<0.000000e+00> : vector<4x128xf32>
    %92 = tpu.matmul %91, %89, %cst_40 {dimension_numbers = #tpu.dot_dimension_numbers<[1], [1], [0], [0], [0, 0, 1, 0], [], []>} : vector<4x16xf32>, vector<128x16xf32>, vector<4x128xf32> -> vector<4x128xf32>
    %93 = vector.extract_strided_slice %51 {offsets = [4, 0], sizes = [4, 16], strides = [1, 1]} : vector<8x16xf32> to vector<4x16xf32>
    %cst_41 = arith.constant dense<0.000000e+00> : vector<4x128xf32>
    %94 = tpu.matmul %93, %90, %cst_41 {dimension_numbers = #tpu.dot_dimension_numbers<[1], [1], [0], [0], [0, 0, 1, 0], [], []>} : vector<4x16xf32>, vector<128x16xf32>, vector<4x128xf32> -> vector<4x128xf32>
    %95 = tpu.concatenate %92, %94 in 0 : vector<4x128xf32>, vector<4x128xf32> -> vector<8x128xf32>
    %cst_42 = arith.constant 14.2857141 : f32
    %96 = vector.broadcast %cst_42 : f32 to vector<8x128xf32>
    %97 = arith.mulf %95, %96 : vector<8x128xf32>
    %c0_43 = arith.constant 0 : index
    %c0_44 = arith.constant 0 : index
    %98 = vector.load %arg14[%c0_43, %c0_44] : memref<8x128xf32, #tpu.memory_space<vmem>>, vector<8x128xf32>
    tpu.vector_store %arg14[%c0_43, %c0_44], %97 {strides = array<i32>} : memref<8x128xf32, #tpu.memory_space<vmem>>, vector<8x128xf32>,
    return
  }
}

module attributes {stable_mosaic.version = 11 : i64} {
  func.func @_mm_fused_kernel(%arg0: memref<6x32xf32, #tpu.memory_space<vmem>>, %arg1: memref<6x8x32xf32, #tpu.memory_space<vmem>>, %arg2: memref<6x8x1xf32, #tpu.memory_space<vmem>>, %arg3: memref<64x32xf32, #tpu.memory_space<vmem>>, %arg4: memref<1x32xf32, #tpu.memory_space<vmem>>, %arg5: memref<6x32xf32, #tpu.memory_space<vmem>>) attributes {dimension_semantics = [], scalar_prefetch = 0 : i64, scratch_operands = 0 : i64, tpu.core_type = #tpu.core_type<tc>} {
    %c0 = arith.constant 0 : index
    %c0_0 = arith.constant 0 : index
    %c0_1 = arith.constant 0 : index
    %0 = vector.load %arg1[%c0, %c0_0, %c0_1] : memref<6x8x32xf32, #tpu.memory_space<vmem>>, vector<6x8x32xf32>
    %c0_2 = arith.constant 0 : index
    %c0_3 = arith.constant 0 : index
    %c0_4 = arith.constant 0 : index
    %1 = vector.load %arg2[%c0_2, %c0_3, %c0_4] : memref<6x8x1xf32, #tpu.memory_space<vmem>>, vector<6x8x1xf32>
    %2 = vector.broadcast %1 : vector<6x8x1xf32> to vector<6x8x32xf32>
    %3 = arith.mulf %0, %2 : vector<6x8x32xf32>
    %cst = arith.constant dense<0.000000e+00> : vector<6x32xf32>
    %4 = vector.multi_reduction <add>, %3, %cst [1] : vector<6x8x32xf32> to vector<6x32xf32>
    %cst_5 = arith.constant dense<0.000000e+00> : vector<6x1xf32>
    %5 = vector.multi_reduction <add>, %1, %cst_5 [1] : vector<6x8x1xf32> to vector<6x1xf32>
    %cst_6 = arith.constant 1.000000e+00 : f32
    %6 = vector.broadcast %cst_6 : f32 to vector<6x1xf32>
    %7 = arith.maximumf %5, %6 : vector<6x1xf32>
    %8 = vector.broadcast %7 : vector<6x1xf32> to vector<6x32xf32>
    %9 = arith.divf %4, %8 : vector<6x32xf32>
    %c0_7 = arith.constant 0 : index
    %c0_8 = arith.constant 0 : index
    %10 = vector.load %arg0[%c0_7, %c0_8] : memref<6x32xf32, #tpu.memory_space<vmem>>, vector<6x32xf32>
    %11 = tpu.concatenate %10, %9 in 1 : vector<6x32xf32>, vector<6x32xf32> -> vector<6x64xf32>
    %c0_9 = arith.constant 0 : index
    %c0_10 = arith.constant 0 : index
    %12 = vector.load %arg3[%c0_9, %c0_10] : memref<64x32xf32, #tpu.memory_space<vmem>>, vector<64x32xf32>
    %cst_11 = arith.constant dense<0.000000e+00> : vector<6x32xf32>
    %13 = tpu.matmul %11, %12, %cst_11 {dimension_numbers = #tpu.dot_dimension_numbers<[1], [0], [0], [1], [0, 0, 1, 1], [], []>} : vector<6x64xf32>, vector<64x32xf32>, vector<6x32xf32> -> vector<6x32xf32>
    %c0_12 = arith.constant 0 : index
    %c0_13 = arith.constant 0 : index
    %14 = vector.load %arg4[%c0_12, %c0_13] : memref<1x32xf32, #tpu.memory_space<vmem>>, vector<1x32xf32>
    %15 = vector.broadcast %14 : vector<1x32xf32> to vector<6x32xf32>
    %16 = arith.addf %13, %15 : vector<6x32xf32>
    %c0_14 = arith.constant 0 : index
    %c0_15 = arith.constant 0 : index
    %17 = vector.load %arg5[%c0_14, %c0_15] : memref<6x32xf32, #tpu.memory_space<vmem>>, vector<6x32xf32>
    tpu.vector_store %arg5[%c0_14, %c0_15], %16 {strides = array<i32>} : memref<6x32xf32, #tpu.memory_space<vmem>>, vector<6x32xf32>,
    return
  }
}

</mosaic_0001>

<llo_original>
// kernel: albef_forward.3
$region0: #{albef_forward.3}
  #allocation0 [shape = 'u32[]', space=smem, size = 0x4, offset = 0x4, fixed_abs, tag = 'smem constant byte address 0x4 - core index']
  #allocation1 [shape = 'u32[144,128]{1,0:T(1,128)}', space=vmem, size = 0x12000, scoped, tag = 'internal scratch']
  %s0 = inlined_call_operand.vmem [shape: f32[6,32], index: 0, kind: input, shape index: {}]
  %s1 = inlined_call_operand.vmem [shape: f32[6,8,32], index: 1, kind: input, shape index: {}]
  %s2 = inlined_call_operand.vmem [shape: f32[6,8,1], index: 2, kind: input, shape index: {}]
  %s3 = inlined_call_operand.vmem [shape: f32[64,32], index: 3, kind: input, shape index: {}]
  %s4 = inlined_call_operand.vmem [shape: f32[1,32], index: 4, kind: input, shape index: {}]
  %s5 = inlined_call_operand.hbm [shape: f32[6,32], index: 5, kind: output, shape index: {}]
  %s6 = sld [smem:[#allocation0]]
  $region30: #{albef_forward.3} parent=0
    _
  %s8 = ssub.s32 1, %s6
  %s9 = scalar_select 0, %s8, %s6
  $region1: #{albef_forward.3} parent=0
    #allocation2 [shape = 'u8[4096]{0}', space=vmem, size = 0x1000, scoped, tag = 'output window, operand 0, single buffered']
    #allocation3 [shape = 's32[1]{0}', space=sflag, size = 0x4, scoped, tag = 'scoped memory for albef_forward.3']
    %10 = vsyncpa [#allocation3], 0
    // Predicated region
    $region2: #{albef_forward.3} parent=1 // pred_check
      _
    $region3: #{albef_forward.3} parent=1 // pred_check_branch
      %12 = sbr.rel (0) target = $region5
    $region4: #{albef_forward.3} parent=1 // pred_region
      _
    $region5: #{albef_forward.3} parent=1 // pred_fallthru
      _
    // Predicated region
    $region6: #{albef_forward.3} parent=1 // pred_check
      _
    $region7: #{albef_forward.3} parent=1 // pred_check_branch
      %14 = sbr.rel (0) target = $region9
    $region8: #{albef_forward.3} parent=1 // pred_region
      _
    $region9: #{albef_forward.3} parent=1 // pred_fallthru
      _
    // Predicated region
    $region10: #{albef_forward.3} parent=1 // pred_check
      _
    $region11: #{albef_forward.3} parent=1 // pred_check_branch
      %16 = sbr.rel (0) target = $region13
    $region12: #{albef_forward.3} parent=1 // pred_region
      _
    $region13: #{albef_forward.3} parent=1 // pred_fallthru
      _
    // Predicated region
    $region14: #{albef_forward.3} parent=1 // pred_check
      _
    $region15: #{albef_forward.3} parent=1 // pred_check_branch
      %18 = sbr.rel (0) target = $region17
    $region16: #{albef_forward.3} parent=1 // pred_region
      _
    $region17: #{albef_forward.3} parent=1 // pred_fallthru
      _
    // Predicated region
    $region18: #{albef_forward.3} parent=1 // pred_check
      _
    $region19: #{albef_forward.3} parent=1 // pred_check_branch
      %20 = sbr.rel (0) target = $region21
    $region20: #{albef_forward.3} parent=1 // pred_region
      _
    $region21: #{albef_forward.3} parent=1 // pred_fallthru
      _
    %v21 = vld [vmem:[%s1] sm:$0xff]
    %v22 = vld [vmem:[%s1 + $0x8] sm:$0xff]
    %v23 = vld [vmem:[%s1 + $0x10] sm:$0xff]
    %v24 = vld [vmem:[%s1 + $0x18] sm:$0xff]
    %v25 = vld [vmem:[%s1 + $0x20] sm:$0xff]
    %v26 = vld [vmem:[%s1 + $0x28] sm:$0xff]
    %v27 = vld [vmem:[%s2] sm:$0xff]
    %v28 = vld [vmem:[%s2 + $0x8] sm:$0xff]
    %v29 = vld [vmem:[%s2 + $0x10] sm:$0xff]
    %v30 = vld [vmem:[%s2 + $0x18] sm:$0xff]
    %v31 = vld [vmem:[%s2 + $0x20] sm:$0xff]
    %v32 = vld [vmem:[%s2 + $0x28] sm:$0xff]
    %34 = vset.pattern.permute.xlu0 0
    %35 = vperm.xlu0 %34, %v27
    %v36 = vpop.permute.xlu0 %35
    %39 = vset.pattern.permute.xlu0 0
    %40 = vperm.xlu0 %39, %v28
    %v41 = vpop.permute.xlu0 %40
    %44 = vset.pattern.permute.xlu0 0
    %45 = vperm.xlu0 %44, %v29
    %v46 = vpop.permute.xlu0 %45
    %49 = vset.pattern.permute.xlu0 0
    %50 = vperm.xlu0 %49, %v30
    %v51 = vpop.permute.xlu0 %50
    %54 = vset.pattern.permute.xlu0 0
    %55 = vperm.xlu0 %54, %v31
    %v56 = vpop.permute.xlu0 %55
    %59 = vset.pattern.permute.xlu0 0
    %60 = vperm.xlu0 %59, %v32
    %v61 = vpop.permute.xlu0 %60
    %v63 = vmul.f32 %v21, %v36
    %v64 = vmul.f32 %v22, %v41
    %v65 = vmul.f32 %v23, %v46
    %v66 = vmul.f32 %v24, %v51
    %v67 = vmul.f32 %v25, %v56
    %v68 = vmul.f32 %v26, %v61
    %vm69 = vcmask 261120
    %v70 = vsel %vm69, %v63, 0.0
    %v71 = vrot.slane %v70, 4
    %v72 = vadd.f32 %v70, %v71
    %v73 = vrot.slane %v72, 2
    %v74 = vadd.f32 %v72, %v73
    %v75 = vrot.slane %v74, 1
    %v76 = vadd.f32 %v74, %v75
    %v77 = vsel %vm69, %v64, 0.0
    %v78 = vrot.slane %v77, 4
    %v79 = vadd.f32 %v77, %v78
    %v80 = vrot.slane %v79, 2
    %v81 = vadd.f32 %v79, %v80
    %v82 = vrot.slane %v81, 1
    %v83 = vadd.f32 %v81, %v82
    %v84 = vsel %vm69, %v65, 0.0
    %v85 = vrot.slane %v84, 4
    %v86 = vadd.f32 %v84, %v85
    %v87 = vrot.slane %v86, 2
    %v88 = vadd.f32 %v86, %v87
    %v89 = vrot.slane %v88, 1
    %v90 = vadd.f32 %v88, %v89
    %v91 = vsel %vm69, %v66, 0.0
    %v92 = vrot.slane %v91, 4
    %v93 = vadd.f32 %v91, %v92
    %v94 = vrot.slane %v93, 2
    %v95 = vadd.f32 %v93, %v94
    %v96 = vrot.slane %v95, 1
    %v97 = vadd.f32 %v95, %v96
    %v98 = vsel %vm69, %v67, 0.0
    %v99 = vrot.slane %v98, 4
    %v100 = vadd.f32 %v98, %v99
    %v101 = vrot.slane %v100, 2
    %v102 = vadd.f32 %v100, %v101
    %v103 = vrot.slane %v102, 1
    %v104 = vadd.f32 %v102, %v103
    %v105 = vsel %vm69, %v68, 0.0
    %v106 = vrot.slane %v105, 4
    %v107 = vadd.f32 %v105, %v106
    %v108 = vrot.slane %v107, 2
    %v109 = vadd.f32 %v107, %v108
    %v110 = vrot.slane %v109, 1
    %v111 = vadd.f32 %v109, %v110
    %vm112 = vcmask 7168
    %v113 = vsel %vm112, %v27, 0.0
    %v114 = vrot.slane %v113, 4
    %v115 = vadd.f32 %v113, %v114
    %v116 = vrot.slane %v115, 2
    %v117 = vadd.f32 %v115, %v116
    %v118 = vrot.slane %v117, 1
    %v119 = vadd.f32 %v117, %v118
    %v120 = vsel %vm112, %v28, 0.0
    %v121 = vrot.slane %v120, 4
    %v122 = vadd.f32 %v120, %v121
    %v123 = vrot.slane %v122, 2
    %v124 = vadd.f32 %v122, %v123
    %v125 = vrot.slane %v124, 1
    %v126 = vadd.f32 %v124, %v125
    %v127 = vsel %vm112, %v29, 0.0
    %v128 = vrot.slane %v127, 4
    %v129 = vadd.f32 %v127, %v128
    %v130 = vrot.slane %v129, 2
    %v131 = vadd.f32 %v129, %v130
    %v132 = vrot.slane %v131, 1
    %v133 = vadd.f32 %v131, %v132
    %v134 = vsel %vm112, %v30, 0.0
    %v135 = vrot.slane %v134, 4
    %v136 = vadd.f32 %v134, %v135
    %v137 = vrot.slane %v136, 2
    %v138 = vadd.f32 %v136, %v137
    %v139 = vrot.slane %v138, 1
    %v140 = vadd.f32 %v138, %v139
    %v141 = vsel %vm112, %v31, 0.0
    %v142 = vrot.slane %v141, 4
    %v143 = vadd.f32 %v141, %v142
    %v144 = vrot.slane %v143, 2
    %v145 = vadd.f32 %v143, %v144
    %v146 = vrot.slane %v145, 1
    %v147 = vadd.f32 %v145, %v146
    %v148 = vsel %vm112, %v32, 0.0
    %v149 = vrot.slane %v148, 4
    %v150 = vadd.f32 %v148, %v149
    %v151 = vrot.slane %v150, 2
    %v152 = vadd.f32 %v150, %v151
    %v153 = vrot.slane %v152, 1
    %v154 = vadd.f32 %v152, %v153
    %v155 = vmax.f32 %v119, 1.0
    %v156 = vmax.f32 %v126, 1.0
    %v157 = vmax.f32 %v133, 1.0
    %v158 = vmax.f32 %v140, 1.0
    %v159 = vmax.f32 %v147, 1.0
    %v160 = vmax.f32 %v154, 1.0
    %162 = vset.pattern.permute.xlu0 0
    %163 = vperm.xlu0 %162, %v155
    %v164 = vpop.permute.xlu0 %163
    %167 = vset.pattern.permute.xlu0 0
    %168 = vperm.xlu0 %167, %v156
    %v169 = vpop.permute.xlu0 %168
    %172 = vset.pattern.permute.xlu0 0
    %173 = vperm.xlu0 %172, %v157
    %v174 = vpop.permute.xlu0 %173
    %177 = vset.pattern.permute.xlu0 0
    %178 = vperm.xlu0 %177, %v158
    %v179 = vpop.permute.xlu0 %178
    %182 = vset.pattern.permute.xlu0 0
    %183 = vperm.xlu0 %182, %v159
    %v184 = vpop.permute.xlu0 %183
    %187 = vset.pattern.permute.xlu0 0
    %188 = vperm.xlu0 %187, %v160
    %v189 = vpop.permute.xlu0 %188
    %v191 = vrcp.pop %v164
    %v192 = vmul.f32 %v76, %v191
    %v193 = vrcp.pop %v169
    %v194 = vmul.f32 %v83, %v193
    %v195 = vrcp.pop %v174
    %v196 = vmul.f32 %v90, %v195
    %v197 = vrcp.pop %v179
    %v198 = vmul.f32 %v97, %v197
    %v199 = vrcp.pop %v184
    %v200 = vmul.f32 %v104, %v199
    %v201 = vrcp.pop %v189
    %v202 = vmul.f32 %v111, %v201
    %v203 = vld [vmem:[%s0] sm:$0x3f]
    %vm210 = vcmask 1041409
    %v211 = vsel %vm210, %v194, %v192
    %vm212 = vcmask 1042434
    %v213 = vsel %vm212, %v196, %v211
    %vm214 = vcmask 1043459
    %v215 = vsel %vm214, %v198, %v213
    %vm216 = vcmask 1044484
    %v217 = vsel %vm216, %v200, %v215
    %vm218 = vcmask 1045509
    %v219 = vsel %vm218, %v202, %v217
    %220 = vrot.lane.b32.xlu0 %v219, 32
    %v221 = vpop.permute.xlu0 %220
    %v223 = vsel %vm69, %v203, %v221
    %v224 = vld [vmem:[%s3] sm:$0xff]
    %v225 = vld [vmem:[%s3 + $0x8] sm:$0xff]
    %v226 = vld [vmem:[%s3 + $0x10] sm:$0xff]
    %v227 = vld [vmem:[%s3 + $0x18] sm:$0xff]
    %v228 = vld [vmem:[%s3 + $0x20] sm:$0xff]
    %v229 = vld [vmem:[%s3 + $0x28] sm:$0xff]
    %v230 = vld [vmem:[%s3 + $0x30] sm:$0xff]
    %v231 = vld [vmem:[%s3 + $0x38] sm:$0xff]
    %v232 = vld [vmem:[%s4] sm:$0x1]
    %v234 = vlaneseq
    %v235 = vshrl.u32 %v234, 7
    %v236 = vsub.s32 0, %v235
    %v237 = vrot.slane %v232, %v236
    %vm239 = vcmask 523264
    %v241 = vsel %vm239, %v223, 0
    %243 = vmatprep.subr.mxu0 0.0
    %244 = vmatpush1.msra.mxu0 %v224
    %245 = vmatprep.subr.mxu0 0.0
    %246 = vmatpush1.msra.mxu0 %v225
    %247 = vmatprep.subr.mxu0 0.0
    %248 = vmatpush1.msra.mxu0 %v226
    %249 = vmatprep.subr.mxu0 0.0
    %250 = vmatpush1.msra.mxu0 %v227
    %251 = vmatprep.subr.mxu0 0.0
    %252 = vmatpush1.msra.mxu0 %v228
    %253 = vmatprep.subr.mxu0 0.0
    %254 = vmatpush1.msra.mxu0 %v229
    %255 = vmatprep.subr.mxu0 0.0
    %256 = vmatpush1.msra.mxu0 %v230
    %257 = vmatprep.subr.mxu0 0.0
    %258 = vmatpush1.msra.mxu0 %v231
    %259 = vmatprep.subr.mxu0 0.0
    %260 = vmatpush1.msra.mxu0 0.0
    %261 = vmatprep.subr.mxu0 0.0
    %262 = vmatpush1.msra.mxu0 0.0
    %263 = vmatprep.subr.mxu0 0.0
    %264 = vmatpush1.msra.mxu0 0.0
    %265 = vmatprep.subr.mxu0 0.0
    %266 = vmatpush1.msra.mxu0 0.0
    %267 = vmatprep.subr.mxu0 0.0
    %268 = vmatpush1.msra.mxu0 0.0
    %269 = vmatprep.subr.mxu0 0.0
    %270 = vmatpush1.msra.mxu0 0.0
    %271 = vmatprep.subr.mxu0 0.0
    %272 = vmatpush1.msra.mxu0 0.0
    %273 = vmatprep.subr.mxu0 0.0
    %274 = vmatpush1.msra.mxu0 0.0
    %275 = vmatprep.subr.mxu0 0.0
    %276 = vmatpush1.msra.mxu0 0.0
    %277 = vmatprep.subr.mxu0 0.0
    %278 = vmatpush1.msra.mxu0 0.0
    %279 = vmatprep.subr.mxu0 0.0
    %280 = vmatpush1.msra.mxu0 0.0
    %281 = vmatprep.subr.mxu0 0.0
    %282 = vmatpush1.msra.mxu0 0.0
    %283 = vmatprep.subr.mxu0 0.0
    %284 = vmatpush1.msra.mxu0 0.0
    %285 = vmatprep.subr.mxu0 0.0
    %286 = vmatpush1.msra.mxu0 0.0
    %287 = vmatprep.subr.mxu0 0.0
    %288 = vmatpush1.msra.mxu0 0.0
    %289 = vmatprep.subr.mxu0 0.0
    %290 = vmatpush1.msra.mxu0 0.0
    %291 = vmatprep.subr.mxu0 0.0
    %292 = vmatpush1.msra.mxu0 0.0
    %293 = vmatprep.subr.mxu0 0.0
    %294 = vmatpush1.msra.mxu0 0.0
    %295 = vmatprep.subr.mxu0 0.0
    %296 = vmatpush1.msra.mxu0 0.0
    %297 = vmatprep.subr.mxu0 0.0
    %298 = vmatpush1.msra.mxu0 0.0
    %299 = vmatprep.subr.mxu0 0.0
    %300 = vmatpush1.msra.mxu0 0.0
    %301 = vmatprep.subr.mxu0 0.0
    %302 = vmatpush1.msra.mxu0 0.0
    %303 = vmatprep.subr.mxu0 0.0
    %304 = vmatpush1.msra.mxu0 0.0
    %305 = vmatprep.subr.mxu0 0.0
    %306 = vmatpush1.msra.mxu0 0.0
    %307 = vmatprep.mubr.f32.mxu0 0.0
    %308 = vmatmul.mubr.f32.gmra.mrb[0].mxu0 %v241
    %v309 = vpop.f32.mrb[0].mxu0
    %v310 = vadd.f32 %v237, %v309
    %v311 = vpop.f32.mrb[0].mxu0
    %312 = vdwg.mxu0
    %vm313 = vcmask 259072
    %314 = vst.msk [vmem:[#allocation2] sm:$0x3f] %vm313, %v310
    // Predicated region
    $region22: #{albef_forward.3} parent=1 // pred_check
      _
    $region23: #{albef_forward.3} parent=1 // pred_check_branch
      %316 = sbr.rel (0) target = $region25
    $region24: #{albef_forward.3} parent=1 // pred_region
      %s318 = ssub.s32 128, 128
      %319 = vsyncadd [#allocation3], %s318
      %s321 = sshll.u32 [#allocation2], 4
      %s322 = int_to_ptr.vmem [resolvable:$true] %s321
      %324 = dma.vmem_to_hbm [thread:$0]  %s322, 128, %s5, [#allocation3]
    $region25: #{albef_forward.3} parent=1 // pred_fallthru
      _
    // Predicated region
    $region26: #{albef_forward.3} parent=1 // pred_check
      _
    $region27: #{albef_forward.3} parent=1 // pred_check_branch
      %326 = sbr.rel (0) target = $region29
    $region28: #{albef_forward.3} parent=1 // pred_region
      %327 = dma.done [#allocation3], 128
    $region29: #{albef_forward.3} parent=1 // pred_fallthru
      _
    %328 = vsyncpa [#allocation3], 1

// kernel: albef_forward.2
$region0: #{albef_forward.2}
  #allocation0 [shape = 'u32[]', space=smem, size = 0x4, offset = 0x4, fixed_abs, tag = 'smem constant byte address 0x4 - core index']
  #allocation1 [shape = 'u32[144,128]{1,0:T(1,128)}', space=vmem, size = 0x12000, scoped, tag = 'internal scratch']
  #allocation2 [shape = 's32[1]{0:T(128)S(6)}', space=smem, size = 0x200, scoped, tag = 'scoped memory for albef_forward.2']
  %s0 = inlined_call_operand.<no memory space> [shape: s32[1], index: 0, kind: input, shape index: {}]
  %s1 = inlined_call_operand.vmem [shape: bf16[8,256], index: 1, kind: input, shape index: {}]
  %s2 = inlined_call_operand.vmem [shape: bf16[32,32], index: 2, kind: input, shape index: {}]
  %s3 = inlined_call_operand.vmem [shape: bf16[256,64], index: 3, kind: input, shape index: {}]
  %s4 = inlined_call_operand.vmem [shape: f32[1,64], index: 4, kind: input, shape index: {}]
  %s5 = inlined_call_operand.vmem [shape: f32[1,64], index: 5, kind: input, shape index: {}]
  %s6 = inlined_call_operand.vmem [shape: bf16[32,64], index: 6, kind: input, shape index: {}]
  %s7 = inlined_call_operand.vmem [shape: f32[1,64], index: 7, kind: input, shape index: {}]
  %s8 = inlined_call_operand.vmem [shape: f32[32,64], index: 8, kind: input, shape index: {}]
  %s9 = inlined_call_operand.vmem [shape: f32[1,64], index: 9, kind: input, shape index: {}]
  %s10 = inlined_call_operand.vmem [shape: f32[64,16], index: 10, kind: input, shape index: {}, may-alias: {10,15}]
  %s11 = inlined_call_operand.vmem [shape: f32[64,16], index: 11, kind: input, shape index: {}, may-alias: {11,16}]
  %s12 = inlined_call_operand.vmem [shape: f32[10,64], index: 12, kind: output, shape index: {0}]
  %s13 = inlined_call_operand.vmem [shape: f32[16,32], index: 13, kind: output, shape index: {1}]
  %s14 = inlined_call_operand.vmem [shape: f32[8,128], index: 14, kind: output, shape index: {2}]
  %s15 = inlined_call_operand.vmem [shape: f32[64,16], index: 15, kind: output, shape index: {3}, may-alias: {10,15}]
  %s16 = inlined_call_operand.vmem [shape: f32[64,16], index: 16, kind: output, shape index: {4}, may-alias: {11,16}]
  %17 = xla_tuple %s12, %s13, %s14, %s15, %s16
  %s18 = sld [smem:[#allocation0]]
  $region90: #{albef_forward.2} parent=0
    _
  %s20 = ssub.s32 1, %s18
  %s21 = scalar_select 0, %s20, %s18
  %22 = sst [smem:[#allocation2]] %s0
  // Predicated region
  $region2: #{albef_forward.2} parent=0 // pred_check
    _
  $region3: #{albef_forward.2} parent=0 // pred_check_branch
    %24 = sbr.rel (0) target = $region5
  $region4: #{albef_forward.2} parent=0 // pred_region
    _
  $region5: #{albef_forward.2} parent=0 // pred_fallthru
    _
  // Predicated region
  $region6: #{albef_forward.2} parent=0 // pred_check
    _
  $region7: #{albef_forward.2} parent=0 // pred_check_branch
    %26 = sbr.rel (0) target = $region9
  $region8: #{albef_forward.2} parent=0 // pred_region
    _
  $region9: #{albef_forward.2} parent=0 // pred_fallthru
    _
  // Predicated region
  $region10: #{albef_forward.2} parent=0 // pred_check
    _
  $region11: #{albef_forward.2} parent=0 // pred_check_branch
    %28 = sbr.rel (0) target = $region13
  $region12: #{albef_forward.2} parent=0 // pred_region
    _
  $region13: #{albef_forward.2} parent=0 // pred_fallthru
    _
  // Predicated region
  $region14: #{albef_forward.2} parent=0 // pred_check
    _
  $region15: #{albef_forward.2} parent=0 // pred_check_branch
    %30 = sbr.rel (0) target = $region17
  $region16: #{albef_forward.2} parent=0 // pred_region
    _
  $region17: #{albef_forward.2} parent=0 // pred_fallthru
    _
  // Predicated region
  $region18: #{albef_forward.2} parent=0 // pred_check
    _
  $region19: #{albef_forward.2} parent=0 // pred_check_branch
    %32 = sbr.rel (0) target = $region21
  $region20: #{albef_forward.2} parent=0 // pred_region
    _
  $region21: #{albef_forward.2} parent=0 // pred_fallthru
    _
  // Predicated region
  $region22: #{albef_forward.2} parent=0 // pred_check
    _
  $region23: #{albef_forward.2} parent=0 // pred_check_branch
    %34 = sbr.rel (0) target = $region25
  $region24: #{albef_forward.2} parent=0 // pred_region
    _
  $region25: #{albef_forward.2} parent=0 // pred_fallthru
    _
  // Predicated region
  $region26: #{albef_forward.2} parent=0 // pred_check
    _
  $region27: #{albef_forward.2} parent=0 // pred_check_branch
    %36 = sbr.rel (0) target = $region29
  $region28: #{albef_forward.2} parent=0 // pred_region
    _
  $region29: #{albef_forward.2} parent=0 // pred_fallthru
    _
  // Predicated region
  $region30: #{albef_forward.2} parent=0 // pred_check
    _
  $region31: #{albef_forward.2} parent=0 // pred_check_branch
    %38 = sbr.rel (0) target = $region33
  $region32: #{albef_forward.2} parent=0 // pred_region
    _
  $region33: #{albef_forward.2} parent=0 // pred_fallthru
    _
  // Predicated region
  $region34: #{albef_forward.2} parent=0 // pred_check
    _
  $region35: #{albef_forward.2} parent=0 // pred_check_branch
    %40 = sbr.rel (0) target = $region37
  $region36: #{albef_forward.2} parent=0 // pred_region
    _
  $region37: #{albef_forward.2} parent=0 // pred_fallthru
    _
  // Predicated region
  $region38: #{albef_forward.2} parent=0 // pred_check
    _
  $region39: #{albef_forward.2} parent=0 // pred_check_branch
    %42 = sbr.rel (0) target = $region41
  $region40: #{albef_forward.2} parent=0 // pred_region
    _
  $region41: #{albef_forward.2} parent=0 // pred_fallthru
    _
  // Predicated region
  $region42: #{albef_forward.2} parent=0 // pred_check
    _
  $region43: #{albef_forward.2} parent=0 // pred_check_branch
    %44 = sbr.rel (0) target = $region45
  $region44: #{albef_forward.2} parent=0 // pred_region
    _
  $region45: #{albef_forward.2} parent=0 // pred_fallthru
    _
  // Predicated region
  $region46: #{albef_forward.2} parent=0 // pred_check
    _
  $region47: #{albef_forward.2} parent=0 // pred_check_branch
    %46 = sbr.rel (0) target = $region49
  $region48: #{albef_forward.2} parent=0 // pred_region
    _
  $region49: #{albef_forward.2} parent=0 // pred_fallthru
    _
  %v48 = vld [vmem:[%s1] sm:$0xff]
  %v49 = vld [vmem:[%s3] sm:$0xf]
  %v50 = vld [vmem:[%s3 + $0x4] sm:$0xf]
  %v51 = vld [vmem:[%s3 + $0x8] sm:$0xf]
  %v52 = vld [vmem:[%s3 + $0xc] sm:$0xf]
  %v53 = vld [vmem:[%s3 + $0x10] sm:$0xf]
  %v54 = vld [vmem:[%s3 + $0x14] sm:$0xf]
  %v55 = vld [vmem:[%s3 + $0x18] sm:$0xf]
  %v56 = vld [vmem:[%s3 + $0x1c] sm:$0xf]
  %v57 = vld [vmem:[%s3 + $0x20] sm:$0xf]
  %v58 = vld [vmem:[%s3 + $0x24] sm:$0xf]
  %v59 = vld [vmem:[%s3 + $0x28] sm:$0xf]
  %v60 = vld [vmem:[%s3 + $0x2c] sm:$0xf]
  %v61 = vld [vmem:[%s3 + $0x30] sm:$0xf]
  %v62 = vld [vmem:[%s3 + $0x34] sm:$0xf]
  %v63 = vld [vmem:[%s3 + $0x38] sm:$0xf]
  %v64 = vld [vmem:[%s3 + $0x3c] sm:$0xf]
  %v65 = vld [vmem:[%s3 + $0x40] sm:$0xf]
  %v66 = vld [vmem:[%s3 + $0x44] sm:$0xf]
  %v67 = vld [vmem:[%s3 + $0x48] sm:$0xf]
  %v68 = vld [vmem:[%s3 + $0x4c] sm:$0xf]
  %v69 = vld [vmem:[%s3 + $0x50] sm:$0xf]
  %v70 = vld [vmem:[%s3 + $0x54] sm:$0xf]
  %v71 = vld [vmem:[%s3 + $0x58] sm:$0xf]
  %v72 = vld [vmem:[%s3 + $0x5c] sm:$0xf]
  %v73 = vld [vmem:[%s3 + $0x60] sm:$0xf]
  %v74 = vld [vmem:[%s3 + $0x64] sm:$0xf]
  %v75 = vld [vmem:[%s3 + $0x68] sm:$0xf]
  %v76 = vld [vmem:[%s3 + $0x6c] sm:$0xf]
  %v77 = vld [vmem:[%s3 + $0x70] sm:$0xf]
  %v78 = vld [vmem:[%s3 + $0x74] sm:$0xf]
  %v79 = vld [vmem:[%s3 + $0x78] sm:$0xf]
  %v80 = vld [vmem:[%s3 + $0x7c] sm:$0xf]
  %v81 = vld [vmem:[%s4] sm:$0x1]
  %v83 = vlaneseq
  %v84 = vshrl.u32 %v83, 7
  %v85 = vsub.s32 0, %v84
  %v86 = vrot.slane %v81, %v85
  %v89 = vunpack.c.l.b16 %v48
  %v90 = vunpack.c.h.b16 %v48
  %v91 = vpack.c.b16 %v89, %v89
  %v92 = vpack.c.b16 %v90, %v90
  %v127 = vunpack.c.l.b16 %v49
  %v128 = vunpack.c.l.b16 %v50
  %v129 = vunpack.c.l.b16 %v51
  %v130 = vunpack.c.l.b16 %v52
  %v131 = vunpack.c.l.b16 %v53
  %v132 = vunpack.c.l.b16 %v54
  %v133 = vunpack.c.l.b16 %v55
  %v134 = vunpack.c.l.b16 %v56
  %v135 = vunpack.c.l.b16 %v57
  %v136 = vunpack.c.l.b16 %v58
  %v137 = vunpack.c.l.b16 %v59
  %v138 = vunpack.c.l.b16 %v60
  %v139 = vunpack.c.l.b16 %v61
  %v140 = vunpack.c.l.b16 %v62
  %v141 = vunpack.c.l.b16 %v63
  %v142 = vunpack.c.l.b16 %v64
  %v143 = vunpack.c.l.b16 %v65
  %v144 = vunpack.c.l.b16 %v66
  %v145 = vunpack.c.l.b16 %v67
  %v146 = vunpack.c.l.b16 %v68
  %v147 = vunpack.c.l.b16 %v69
  %v148 = vunpack.c.l.b16 %v70
  %v149 = vunpack.c.l.b16 %v71
  %v150 = vunpack.c.l.b16 %v72
  %v151 = vunpack.c.l.b16 %v73
  %v152 = vunpack.c.l.b16 %v74
  %v153 = vunpack.c.l.b16 %v75
  %v154 = vunpack.c.l.b16 %v76
  %v155 = vunpack.c.l.b16 %v77
  %v156 = vunpack.c.l.b16 %v78
  %v157 = vunpack.c.l.b16 %v79
  %v158 = vunpack.c.l.b16 %v80
  %v159 = vpack.c.b16 %v128, %v127
  %v160 = vpack.c.b16 %v130, %v129
  %v161 = vpack.c.b16 %v132, %v131
  %v162 = vpack.c.b16 %v134, %v133
  %v163 = vpack.c.b16 %v136, %v135
  %v164 = vpack.c.b16 %v138, %v137
  %v165 = vpack.c.b16 %v140, %v139
  %v166 = vpack.c.b16 %v142, %v141
  %v167 = vpack.c.b16 %v144, %v143
  %v168 = vpack.c.b16 %v146, %v145
  %v169 = vpack.c.b16 %v148, %v147
  %v170 = vpack.c.b16 %v150, %v149
  %v171 = vpack.c.b16 %v152, %v151
  %v172 = vpack.c.b16 %v154, %v153
  %v173 = vpack.c.b16 %v156, %v155
  %v174 = vpack.c.b16 %v158, %v157
  %191 = vmatprep.subr.bf16.mxu0 0
  %192 = vmatpush1.bf16.msra.mxu0 %v159
  %193 = vmatprep.subr.bf16.mxu0 0
  %194 = vmatpush1.bf16.msra.mxu0 %v160
  %195 = vmatprep.subr.bf16.mxu0 0
  %196 = vmatpush1.bf16.msra.mxu0 %v161
  %197 = vmatprep.subr.bf16.mxu0 0
  %198 = vmatpush1.bf16.msra.mxu0 %v162
  %199 = vmatprep.subr.bf16.mxu0 0
  %200 = vmatpush1.bf16.msra.mxu0 %v163
  %201 = vmatprep.subr.bf16.mxu0 0
  %202 = vmatpush1.bf16.msra.mxu0 %v164
  %203 = vmatprep.subr.bf16.mxu0 0
  %204 = vmatpush1.bf16.msra.mxu0 %v165
  %205 = vmatprep.subr.bf16.mxu0 0
  %206 = vmatpush1.bf16.msra.mxu0 %v166
  %207 = vmatprep.subr.bf16.mxu0 0
  %208 = vmatpush1.bf16.msra.mxu0 %v167
  %209 = vmatprep.subr.bf16.mxu0 0
  %210 = vmatpush1.bf16.msra.mxu0 %v168
  %211 = vmatprep.subr.bf16.mxu0 0
  %212 = vmatpush1.bf16.msra.mxu0 %v169
  %213 = vmatprep.subr.bf16.mxu0 0
  %214 = vmatpush1.bf16.msra.mxu0 %v170
  %215 = vmatprep.subr.bf16.mxu0 0
  %216 = vmatpush1.bf16.msra.mxu0 %v171
  %217 = vmatprep.subr.bf16.mxu0 0
  %218 = vmatpush1.bf16.msra.mxu0 %v172
  %219 = vmatprep.subr.bf16.mxu0 0
  %220 = vmatpush1.bf16.msra.mxu0 %v173
  %221 = vmatprep.subr.bf16.mxu0 0
  %222 = vmatpush1.bf16.msra.mxu0 %v174
  %223 = vmatprep.mubr.bf16.mxu0 %v92
  %224 = vmatmul.mubr.bf16.gmra.mrb[0].mxu0 %v91
  %v225 = vpop.f32.mrb[0].mxu0
  %v226 = vadd.f32 %v86, %v225
  %v227 = vpop.f32.mrb[0].mxu0
  %v228 = vpop.f32.mrb[0].mxu0
  %v229 = vpop.f32.mrb[0].mxu0
  %230 = vdwg.mxu0
  %v231 = vld [vmem:[%s5] sm:$0x1]
  %vm232 = vcmask 516096
  %233 = vst.msk [vmem:[%s12] sm:$0x1] %vm232, %v231
  %vm234 = vcmask 519168
  %235 = vst.msk [vmem:[%s12 + $0x1] sm:$0xf] %vm234, %v226
  %236 = vst.msk [vmem:[%s12 + $0x5] sm:$0x1] %vm232, %v231
  %vm237 = vcmask 523268
  %238 = vst.msk [vmem:[%s12 + $0x2] sm:$0xf0] %vm237, %v226
  %v239 = vld [vmem:[%s2] sm:$0xf]
  %v240 = vld [vmem:[%s2 + $0x4] sm:$0xf]
  %v241 = vld [vmem:[%s2 + $0x8] sm:$0xf]
  %v242 = vld [vmem:[%s2 + $0xc] sm:$0xf]
  %v243 = vld [vmem:[%s6] sm:$0xf]
  %v244 = vld [vmem:[%s6 + $0x4] sm:$0xf]
  %v245 = vld [vmem:[%s6 + $0x8] sm:$0xf]
  %v246 = vld [vmem:[%s6 + $0xc] sm:$0xf]
  %v247 = vld [vmem:[%s7] sm:$0x1]
  %v249 = vlaneseq
  %v250 = vshrl.u32 %v249, 7
  %v251 = vsub.s32 0, %v250
  %v252 = vrot.slane %v247, %v251
  %v258 = vunpack.c.l.b16 %v239
  %v259 = vunpack.c.l.b16 %v240
  %v260 = vunpack.c.l.b16 %v241
  %v261 = vunpack.c.l.b16 %v242
  %v262 = vpack.c.b16 %v259, %v258
  %v263 = vpack.c.b16 %v261, %v260
  %v268 = vunpack.c.l.b16 %v243
  %v269 = vunpack.c.l.b16 %v244
  %v270 = vunpack.c.l.b16 %v245
  %v271 = vunpack.c.l.b16 %v246
  %v272 = vpack.c.b16 %v269, %v268
  %v273 = vpack.c.b16 %v271, %v270
  %vm276 = vcmask 261120
  %v278 = vsel %vm276, %v262, 0
  %v281 = vsel %vm276, %v263, 0
  %283 = vmatprep.subr.bf16.mxu0 0
  %284 = vmatpush1.bf16.msra.mxu0 %v272
  %285 = vmatprep.subr.bf16.mxu0 0
  %286 = vmatpush1.bf16.msra.mxu0 %v273
  %287 = vmatprep.subr.bf16.mxu0 0
  %288 = vmatpush1.bf16.msra.mxu0 0
  %289 = vmatprep.subr.bf16.mxu0 0
  %290 = vmatpush1.bf16.msra.mxu0 0
  %291 = vmatprep.subr.bf16.mxu0 0
  %292 = vmatpush1.bf16.msra.mxu0 0
  %293 = vmatprep.subr.bf16.mxu0 0
  %294 = vmatpush1.bf16.msra.mxu0 0
  %295 = vmatprep.subr.bf16.mxu0 0
  %296 = vmatpush1.bf16.msra.mxu0 0
  %297 = vmatprep.subr.bf16.mxu0 0
  %298 = vmatpush1.bf16.msra.mxu0 0
  %299 = vmatprep.subr.bf16.mxu0 0
  %300 = vmatpush1.bf16.msra.mxu0 0
  %301 = vmatprep.subr.bf16.mxu0 0
  %302 = vmatpush1.bf16.msra.mxu0 0
  %303 = vmatprep.subr.bf16.mxu0 0
  %304 = vmatpush1.bf16.msra.mxu0 0
  %305 = vmatprep.subr.bf16.mxu0 0
  %306 = vmatpush1.bf16.msra.mxu0 0
  %307 = vmatprep.subr.bf16.mxu0 0
  %308 = vmatpush1.bf16.msra.mxu0 0
  %309 = vmatprep.subr.bf16.mxu0 0
  %310 = vmatpush1.bf16.msra.mxu0 0
  %311 = vmatprep.subr.bf16.mxu0 0
  %312 = vmatpush1.bf16.msra.mxu0 0
  %313 = vmatprep.subr.bf16.mxu0 0
  %314 = vmatpush1.bf16.msra.mxu0 0
  %315 = vmatprep.mubr.bf16.mxu0 0
  %316 = vmatmul.mubr.bf16.gmra.mrb[0].mxu0 %v278
  %v317 = vpop.f32.mrb[0].mxu0
  %v318 = vadd.f32 %v252, %v317
  %v319 = vpop.f32.mrb[0].mxu0
  %v320 = vpop.f32.mrb[0].mxu0
  %v321 = vadd.f32 %v252, %v320
  %v322 = vpop.f32.mrb[0].mxu0
  %323 = vmatprep.mubr.bf16.mxu0 0
  %324 = vmatmul.mubr.bf16.gmra.mrb[0].mxu0 %v281
  %v325 = vpop.f32.mrb[0].mxu0
  %v326 = vadd.f32 %v252, %v325
  %v327 = vpop.f32.mrb[0].mxu0
  %v328 = vpop.f32.mrb[0].mxu0
  %v329 = vadd.f32 %v252, %v328
  %v330 = vpop.f32.mrb[0].mxu0
  %331 = vdwg.mxu0
  %332 = vst.msk [vmem:[%s13] sm:$0xff] %vm276, %v318
  %333 = vst.msk [vmem:[%s13 + $0x8] sm:$0xff] %vm276, %v321
  %v335 = vlaneseq
  %v336 = vshrl.u32 %v335, 7
  %v337 = vsub.s32 0, %v336
  %v338 = vrot.slane %v231, %v337
  %v341 = vrot.slane %v321, 7
  %vm343 = vcmask 1040384
  %v344 = vsel %vm343, %v318, %v341
  %v346 = vrot.slane %v329, 7
  %v348 = vsel %vm343, %v326, %v346
  %349 = vrot.lane.b32.xlu0 %v338, 96
  %v350 = vpop.permute.xlu0 %349
  %v353 = vrot.slane %v344, 4
  %v356 = vrot.slane %v348, 2
  %357 = vrot.lane.b32.xlu0 %v356, 96
  %v358 = vpop.permute.xlu0 %357
  %vm360 = vcmask 1041408
  %v361 = vsel %vm360, %v338, %v350
  %vm362 = vcmask 1043456
  %v363 = vsel %vm362, %v361, %v353
  %vm364 = vcmask 1045504
  %v365 = vsel %vm364, %v363, %v358
  %v366 = vld [vmem:[%s8] sm:$0xff]
  %v367 = vld [vmem:[%s8 + $0x8] sm:$0xff]
  %v368 = vld [vmem:[%s8 + $0x10] sm:$0xff]
  %v369 = vld [vmem:[%s8 + $0x18] sm:$0xff]
  %v370 = vld [vmem:[%s9] sm:$0x1]
  %v372 = vlaneseq
  %v373 = vshrl.u32 %v372, 7
  %v374 = vsub.s32 0, %v373
  %v375 = vrot.slane %v370, %v374
  %v378 = vsel %vm276, %v365, 0
  %380 = vmatprep.subr.mxu0 0.0
  %381 = vmatpush1.msra.mxu0 %v366
  %382 = vmatprep.subr.mxu0 0.0
  %383 = vmatpush1.msra.mxu0 %v367
  %384 = vmatprep.subr.mxu0 0.0
  %385 = vmatpush1.msra.mxu0 %v368
  %386 = vmatprep.subr.mxu0 0.0
  %387 = vmatpush1.msra.mxu0 %v369
  %388 = vmatprep.subr.mxu0 0.0
  %389 = vmatpush1.msra.mxu0 0.0
  %390 = vmatprep.subr.mxu0 0.0
  %391 = vmatpush1.msra.mxu0 0.0
  %392 = vmatprep.subr.mxu0 0.0
  %393 = vmatpush1.msra.mxu0 0.0
  %394 = vmatprep.subr.mxu0 0.0
  %395 = vmatpush1.msra.mxu0 0.0
  %396 = vmatprep.subr.mxu0 0.0
  %397 = vmatpush1.msra.mxu0 0.0
  %398 = vmatprep.subr.mxu0 0.0
  %399 = vmatpush1.msra.mxu0 0.0
  %400 = vmatprep.subr.mxu0 0.0
  %401 = vmatpush1.msra.mxu0 0.0
  %402 = vmatprep.subr.mxu0 0.0
  %403 = vmatpush1.msra.mxu0 0.0
  %404 = vmatprep.subr.mxu0 0.0
  %405 = vmatpush1.msra.mxu0 0.0
  %406 = vmatprep.subr.mxu0 0.0
  %407 = vmatpush1.msra.mxu0 0.0
  %408 = vmatprep.subr.mxu0 0.0
  %409 = vmatpush1.msra.mxu0 0.0
  %410 = vmatprep.subr.mxu0 0.0
  %411 = vmatpush1.msra.mxu0 0.0
  %412 = vmatprep.subr.mxu0 0.0
  %413 = vmatpush1.msra.mxu0 0.0
  %414 = vmatprep.subr.mxu0 0.0
  %415 = vmatpush1.msra.mxu0 0.0
  %416 = vmatprep.subr.mxu0 0.0
  %417 = vmatpush1.msra.mxu0 0.0
  %418 = vmatprep.subr.mxu0 0.0
  %419 = vmatpush1.msra.mxu0 0.0
  %420 = vmatprep.subr.mxu0 0.0
  %421 = vmatpush1.msra.mxu0 0.0
  %422 = vmatprep.subr.mxu0 0.0
  %423 = vmatpush1.msra.mxu0 0.0
  %424 = vmatprep.subr.mxu0 0.0
  %425 = vmatpush1.msra.mxu0 0.0
  %426 = vmatprep.subr.mxu0 0.0
  %427 = vmatpush1.msra.mxu0 0.0
  %428 = vmatprep.subr.mxu0 0.0
  %429 = vmatpush1.msra.mxu0 0.0
  %430 = vmatprep.subr.mxu0 0.0
  %431 = vmatpush1.msra.mxu0 0.0
  %432 = vmatprep.subr.mxu0 0.0
  %433 = vmatpush1.msra.mxu0 0.0
  %434 = vmatprep.subr.mxu0 0.0
  %435 = vmatpush1.msra.mxu0 0.0
  %436 = vmatprep.subr.mxu0 0.0
  %437 = vmatpush1.msra.mxu0 0.0
  %438 = vmatprep.subr.mxu0 0.0
  %439 = vmatpush1.msra.mxu0 0.0
  %440 = vmatprep.subr.mxu0 0.0
  %441 = vmatpush1.msra.mxu0 0.0
  %442 = vmatprep.subr.mxu0 0.0
  %443 = vmatpush1.msra.mxu0 0.0
  %444 = vmatprep.mubr.f32.mxu0 0.0
  %445 = vmatmul.mubr.f32.gmra.mrb[0].mxu0 %v378
  %v446 = vpop.f32.mrb[0].mxu0
  %v447 = vadd.f32 %v375, %v446
  %v448 = vpop.f32.mrb[0].mxu0
  %449 = vdwg.mxu0
  %451 = vrot.lane.b32.xlu0 %v447, 112
  %v452 = vpop.permute.xlu0 %451
  %454 = vrot.lane.b32.xlu0 %v447, 96
  %v455 = vpop.permute.xlu0 %454
  %457 = vrot.lane.b32.xlu0 %v447, 80
  %v458 = vpop.permute.xlu0 %457
  %v460 = vsel %vm360, %v447, %v452
  %v461 = vsel %vm362, %v460, %v455
  %v462 = vsel %vm364, %v461, %v458
  %v463 = vmul.f32 %v462, %v462
  %vm464 = vcmask 130048
  %v465 = vsel %vm464, %v463, 0.0
  %466 = vadd.xlane.f32.xlu0 %v465
  %v467 = vpop.xlane.xlu0 %466
  %v468 = vrsqrt.pop %v467
  %v469 = vmul.f32 %v467, %v468
  %vm470 = vcmp.eq.f32.partialorder %v467, inf
  %v471 = vsel %vm470, %v467, %v469
  %vm472 = vcmp.eq.f32.partialorder %v467, 0.0
  %v473 = vand.u32 %v467, 2147483648
  %v474 = vsel %vm472, %v473, %v471
  %v475 = vmax.f32 %v474, 1e-12
  %v476 = vrcp.pop %v475
  %v477 = vmul.f32 %v462, %v476
  %s478 = sld [smem:[#allocation2]]
  %v479 = vlaneseq
  %v480 = vshrl.u32 %v479, 7
  %v481 = vadd.s32 %v480, 8
  %v482 = vadd.s32 %v480, 16
  %v483 = vadd.s32 %v480, 24
  %v484 = vadd.s32 %v480, 32
  %v485 = vadd.s32 %v480, 40
  %v486 = vadd.s32 %v480, 48
  %v487 = vadd.s32 %v480, 56
  %v488 = vld [vmem:[%s10] sm:$0xff]
  %v489 = vld [vmem:[%s10 + $0x8] sm:$0xff]
  %v490 = vld [vmem:[%s10 + $0x10] sm:$0xff]
  %v491 = vld [vmem:[%s10 + $0x18] sm:$0xff]
  %v492 = vld [vmem:[%s10 + $0x20] sm:$0xff]
  %v493 = vld [vmem:[%s10 + $0x28] sm:$0xff]
  %v494 = vld [vmem:[%s10 + $0x30] sm:$0xff]
  %v495 = vld [vmem:[%s10 + $0x38] sm:$0xff]
  %v496 = vld [vmem:[%s11] sm:$0xff]
  %v497 = vld [vmem:[%s11 + $0x8] sm:$0xff]
  %v498 = vld [vmem:[%s11 + $0x10] sm:$0xff]
  %v499 = vld [vmem:[%s11 + $0x18] sm:$0xff]
  %v500 = vld [vmem:[%s11 + $0x20] sm:$0xff]
  %v501 = vld [vmem:[%s11 + $0x28] sm:$0xff]
  %v502 = vld [vmem:[%s11 + $0x30] sm:$0xff]
  %v503 = vld [vmem:[%s11 + $0x38] sm:$0xff]
  %v504 = vstv %s478
  %vm505 = vcmp.eq.s32.totalorder %v480, %v504
  %vm506 = vcmp.eq.s32.totalorder %v481, %v504
  %vm507 = vcmp.eq.s32.totalorder %v482, %v504
  %vm508 = vcmp.eq.s32.totalorder %v483, %v504
  %vm509 = vcmp.eq.s32.totalorder %v484, %v504
  %vm510 = vcmp.eq.s32.totalorder %v485, %v504
  %vm511 = vcmp.eq.s32.totalorder %v486, %v504
  %vm512 = vcmp.eq.s32.totalorder %v487, %v504
  %v513 = vlaneseq
  %v514 = vshrl.u32 %v513, 7
  %v515 = vsub.s32 2, %v514
  %v516 = vrot.slane %v477, %v515
  %v517 = vsel %vm505, %v516, %v488
  %v518 = vsel %vm506, %v516, %v489
  %v519 = vsel %vm507, %v516, %v490
  %v520 = vsel %vm508, %v516, %v491
  %v521 = vsel %vm509, %v516, %v492
  %v522 = vsel %vm510, %v516, %v493
  %v523 = vsel %vm511, %v516, %v494
  %v524 = vsel %vm512, %v516, %v495
  %v525 = vlaneseq
  %v526 = vshrl.u32 %v525, 7
  %v527 = vsub.s32 6, %v526
  %v528 = vrot.slane %v477, %v527
  %v529 = vsel %vm505, %v528, %v496
  %v530 = vsel %vm506, %v528, %v497
  %v531 = vsel %vm507, %v528, %v498
  %v532 = vsel %vm508, %v528, %v499
  %v533 = vsel %vm509, %v528, %v500
  %v534 = vsel %vm510, %v528, %v501
  %v535 = vsel %vm511, %v528, %v502
  %v536 = vsel %vm512, %v528, %v503
  %s537 = sadd.s32 %s478, 1
  %v538 = vstv %s537
  %vm539 = vcmp.eq.s32.totalorder %v480, %v538
  %vm540 = vcmp.eq.s32.totalorder %v481, %v538
  %vm541 = vcmp.eq.s32.totalorder %v482, %v538
  %vm542 = vcmp.eq.s32.totalorder %v483, %v538
  %vm543 = vcmp.eq.s32.totalorder %v484, %v538
  %vm544 = vcmp.eq.s32.totalorder %v485, %v538
  %vm545 = vcmp.eq.s32.totalorder %v486, %v538
  %vm546 = vcmp.eq.s32.totalorder %v487, %v538
  %v547 = vlaneseq
  %v548 = vshrl.u32 %v547, 7
  %v549 = vsub.s32 3, %v548
  %v550 = vrot.slane %v477, %v549
  %v551 = vsel %vm539, %v550, %v517
  %v552 = vsel %vm540, %v550, %v518
  %v553 = vsel %vm541, %v550, %v519
  %v554 = vsel %vm542, %v550, %v520
  %v555 = vsel %vm543, %v550, %v521
  %v556 = vsel %vm544, %v550, %v522
  %v557 = vsel %vm545, %v550, %v523
  %v558 = vsel %vm546, %v550, %v524
  %v559 = vlaneseq
  %v560 = vshrl.u32 %v559, 7
  %v561 = vsub.s32 7, %v560
  %v562 = vrot.slane %v477, %v561
  %v563 = vsel %vm539, %v562, %v529
  %v564 = vsel %vm540, %v562, %v530
  %v565 = vsel %vm541, %v562, %v531
  %v566 = vsel %vm542, %v562, %v532
  %v567 = vsel %vm543, %v562, %v533
  %v568 = vsel %vm544, %v562, %v534
  %v569 = vsel %vm545, %v562, %v535
  %v570 = vsel %vm546, %v562, %v536
  %571 = vst.msk [vmem:[%s15] sm:$0xff] %vm464, %v551
  %572 = vst.msk [vmem:[%s15 + $0x8] sm:$0xff] %vm464, %v552
  %573 = vst.msk [vmem:[%s15 + $0x10] sm:$0xff] %vm464, %v553
  %574 = vst.msk [vmem:[%s15 + $0x18] sm:$0xff] %vm464, %v554
  %575 = vst.msk [vmem:[%s15 + $0x20] sm:$0xff] %vm464, %v555
  %576 = vst.msk [vmem:[%s15 + $0x28] sm:$0xff] %vm464, %v556
  %577 = vst.msk [vmem:[%s15 + $0x30] sm:$0xff] %vm464, %v557
  %578 = vst.msk [vmem:[%s15 + $0x38] sm:$0xff] %vm464, %v558
  %579 = vst.msk [vmem:[%s16] sm:$0xff] %vm464, %v563
  %580 = vst.msk [vmem:[%s16 + $0x8] sm:$0xff] %vm464, %v564
  %581 = vst.msk [vmem:[%s16 + $0x10] sm:$0xff] %vm464, %v565
  %582 = vst.msk [vmem:[%s16 + $0x18] sm:$0xff] %vm464, %v566
  %583 = vst.msk [vmem:[%s16 + $0x20] sm:$0xff] %vm464, %v567
  %584 = vst.msk [vmem:[%s16 + $0x28] sm:$0xff] %vm464, %v568
  %585 = vst.msk [vmem:[%s16 + $0x30] sm:$0xff] %vm464, %v569
  %586 = vst.msk [vmem:[%s16 + $0x38] sm:$0xff] %vm464, %v570
  %v588 = vrot.slane %v477, 6
  %v598 = vrot.slane %v563, 6
  %v599 = vrot.slane %v564, 6
  %v600 = vsel %vm360, %v598, %v599
  %v601 = vrot.slane %v565, 6
  %v602 = vsel %vm360, %v599, %v601
  %v603 = vrot.slane %v566, 6
  %v604 = vsel %vm360, %v601, %v603
  %v605 = vrot.slane %v567, 6
  %v606 = vsel %vm360, %v603, %v605
  %v607 = vrot.slane %v568, 6
  %v608 = vsel %vm360, %v605, %v607
  %v609 = vrot.slane %v569, 6
  %v610 = vsel %vm360, %v607, %v609
  %v611 = vrot.slane %v570, 6
  %v612 = vsel %vm360, %v609, %v611
  %v615 = vsel %vm360, %v588, %v598
  %v616 = vsel %vm360, %v611, 0.0
  %v617 = vrot.slane %v477, 2
  %v627 = vrot.slane %v551, 6
  %v628 = vrot.slane %v552, 6
  %v629 = vsel %vm360, %v627, %v628
  %v630 = vrot.slane %v553, 6
  %v631 = vsel %vm360, %v628, %v630
  %v632 = vrot.slane %v554, 6
  %v633 = vsel %vm360, %v630, %v632
  %v634 = vrot.slane %v555, 6
  %v635 = vsel %vm360, %v632, %v634
  %v636 = vrot.slane %v556, 6
  %v637 = vsel %vm360, %v634, %v636
  %v638 = vrot.slane %v557, 6
  %v639 = vsel %vm360, %v636, %v638
  %v640 = vrot.slane %v558, 6
  %v641 = vsel %vm360, %v638, %v640
  %v644 = vsel %vm360, %v617, %v627
  %v645 = vsel %vm360, %v640, 0.0
  %v646 = vsel %vm464, %v477, 0
  %v649 = vsel %vm464, %v615, 0
  %v651 = vsel %vm464, %v600, 0
  %v653 = vsel %vm464, %v602, 0
  %v655 = vsel %vm464, %v604, 0
  %v657 = vsel %vm464, %v606, 0
  %v659 = vsel %vm464, %v608, 0
  %v661 = vsel %vm464, %v610, 0
  %v663 = vsel %vm464, %v612, 0
  %v666 = vsel %vm464, %v616, 0
  %v669 = vsel %vm464, 0.0, 0
  %671 = vmatprep.subr.mxu0 0.0
  %672 = vmatpush1.xpose.msra.mxu0 %v649
  %673 = vmatprep.subr.mxu0 0.0
  %674 = vmatpush1.xpose.msra.mxu0 %v651
  %675 = vmatprep.subr.mxu0 0.0
  %676 = vmatpush1.xpose.msra.mxu0 %v653
  %677 = vmatprep.subr.mxu0 0.0
  %678 = vmatpush1.xpose.msra.mxu0 %v655
  %679 = vmatprep.subr.mxu0 0.0
  %680 = vmatpush1.xpose.msra.mxu0 %v657
  %681 = vmatprep.subr.mxu0 0.0
  %682 = vmatpush1.xpose.msra.mxu0 %v659
  %683 = vmatprep.subr.mxu0 0.0
  %684 = vmatpush1.xpose.msra.mxu0 %v661
  %685 = vmatprep.subr.mxu0 0.0
  %686 = vmatpush1.xpose.msra.mxu0 %v663
  %687 = vmatprep.subr.mxu0 0.0
  %688 = vmatpush1.xpose.msra.mxu0 %v666
  %689 = vmatprep.subr.mxu0 0.0
  %690 = vmatpush1.xpose.msra.mxu0 %v669
  %691 = vmatprep.subr.mxu0 0.0
  %692 = vmatpush1.xpose.msra.mxu0 %v669
  %693 = vmatprep.subr.mxu0 0.0
  %694 = vmatpush1.xpose.msra.mxu0 %v669
  %695 = vmatprep.subr.mxu0 0.0
  %696 = vmatpush1.xpose.msra.mxu0 %v669
  %697 = vmatprep.subr.mxu0 0.0
  %698 = vmatpush1.xpose.msra.mxu0 %v669
  %699 = vmatprep.subr.mxu0 0.0
  %700 = vmatpush1.xpose.msra.mxu0 %v669
  %701 = vmatprep.subr.mxu0 0.0
  %702 = vmatpush1.xpose.msra.mxu0 %v669
  %703 = vmatprep.subr.mxu0 0.0
  %704 = vmatpush1.xpose.msra.mxu0 0.0
  %705 = vmatprep.subr.mxu0 0.0
  %706 = vmatpush1.xpose.msra.mxu0 0.0
  %707 = vmatprep.subr.mxu0 0.0
  %708 = vmatpush1.xpose.msra.mxu0 0.0
  %709 = vmatprep.subr.mxu0 0.0
  %710 = vmatpush1.xpose.msra.mxu0 0.0
  %711 = vmatprep.subr.mxu0 0.0
  %712 = vmatpush1.xpose.msra.mxu0 0.0
  %713 = vmatprep.subr.mxu0 0.0
  %714 = vmatpush1.xpose.msra.mxu0 0.0
  %715 = vmatprep.subr.mxu0 0.0
  %716 = vmatpush1.xpose.msra.mxu0 0.0
  %717 = vmatprep.subr.mxu0 0.0
  %718 = vmatpush1.xpose.msra.mxu0 0.0
  %719 = vmatprep.subr.mxu0 0.0
  %720 = vmatpush1.xpose.msra.mxu0 0.0
  %721 = vmatprep.subr.mxu0 0.0
  %722 = vmatpush1.xpose.msra.mxu0 0.0
  %723 = vmatprep.subr.mxu0 0.0
  %724 = vmatpush1.xpose.msra.mxu0 0.0
  %725 = vmatprep.subr.mxu0 0.0
  %726 = vmatpush1.xpose.msra.mxu0 0.0
  %727 = vmatprep.subr.mxu0 0.0
  %728 = vmatpush1.xpose.msra.mxu0 0.0
  %729 = vmatprep.subr.mxu0 0.0
  %730 = vmatpush1.xpose.msra.mxu0 0.0
  %731 = vmatprep.subr.mxu0 0.0
  %732 = vmatpush1.xpose.msra.mxu0 0.0
  %733 = vmatprep.subr.mxu0 0.0
  %734 = vmatpush1.xpose.msra.mxu0 0.0
  %735 = vmatprep.mubr.f32.mxu0 0.0
  %736 = vmatmul.mubr.f32.gmra.mrb[0].mxu0 %v646
  %v737 = vpop.f32.mrb[0].mxu0
  %v738 = vadd.f32 0.0, %v737
  %v739 = vpop.f32.mrb[0].mxu0
  %740 = vdwg.mxu0
  %v741 = vrot.slane %v477, 4
  %v742 = vsel %vm464, %v741, 0
  %v745 = vsel %vm464, %v644, 0
  %v747 = vsel %vm464, %v629, 0
  %v749 = vsel %vm464, %v631, 0
  %v751 = vsel %vm464, %v633, 0
  %v753 = vsel %vm464, %v635, 0
  %v755 = vsel %vm464, %v637, 0
  %v757 = vsel %vm464, %v639, 0
  %v759 = vsel %vm464, %v641, 0
  %v762 = vsel %vm464, %v645, 0
  %764 = vmatprep.subr.mxu0 0.0
  %765 = vmatpush1.xpose.msra.mxu0 %v745
  %766 = vmatprep.subr.mxu0 0.0
  %767 = vmatpush1.xpose.msra.mxu0 %v747
  %768 = vmatprep.subr.mxu0 0.0
  %769 = vmatpush1.xpose.msra.mxu0 %v749
  %770 = vmatprep.subr.mxu0 0.0
  %771 = vmatpush1.xpose.msra.mxu0 %v751
  %772 = vmatprep.subr.mxu0 0.0
  %773 = vmatpush1.xpose.msra.mxu0 %v753
  %774 = vmatprep.subr.mxu0 0.0
  %775 = vmatpush1.xpose.msra.mxu0 %v755
  %776 = vmatprep.subr.mxu0 0.0
  %777 = vmatpush1.xpose.msra.mxu0 %v757
  %778 = vmatprep.subr.mxu0 0.0
  %779 = vmatpush1.xpose.msra.mxu0 %v759
  %780 = vmatprep.subr.mxu0 0.0
  %781 = vmatpush1.xpose.msra.mxu0 %v762
  %782 = vmatprep.subr.mxu0 0.0
  %783 = vmatpush1.xpose.msra.mxu0 %v669
  %784 = vmatprep.subr.mxu0 0.0
  %785 = vmatpush1.xpose.msra.mxu0 %v669
  %786 = vmatprep.subr.mxu0 0.0
  %787 = vmatpush1.xpose.msra.mxu0 %v669
  %788 = vmatprep.subr.mxu0 0.0
  %789 = vmatpush1.xpose.msra.mxu0 %v669
  %790 = vmatprep.subr.mxu0 0.0
  %791 = vmatpush1.xpose.msra.mxu0 %v669
  %792 = vmatprep.subr.mxu0 0.0
  %793 = vmatpush1.xpose.msra.mxu0 %v669
  %794 = vmatprep.subr.mxu0 0.0
  %795 = vmatpush1.xpose.msra.mxu0 %v669
  %796 = vmatprep.subr.mxu0 0.0
  %797 = vmatpush1.xpose.msra.mxu0 0.0
  %798 = vmatprep.subr.mxu0 0.0
  %799 = vmatpush1.xpose.msra.mxu0 0.0
  %800 = vmatprep.subr.mxu0 0.0
  %801 = vmatpush1.xpose.msra.mxu0 0.0
  %802 = vmatprep.subr.mxu0 0.0
  %803 = vmatpush1.xpose.msra.mxu0 0.0
  %804 = vmatprep.subr.mxu0 0.0
  %805 = vmatpush1.xpose.msra.mxu0 0.0
  %806 = vmatprep.subr.mxu0 0.0
  %807 = vmatpush1.xpose.msra.mxu0 0.0
  %808 = vmatprep.subr.mxu0 0.0
  %809 = vmatpush1.xpose.msra.mxu0 0.0
  %810 = vmatprep.subr.mxu0 0.0
  %811 = vmatpush1.xpose.msra.mxu0 0.0
  %812 = vmatprep.subr.mxu0 0.0
  %813 = vmatpush1.xpose.msra.mxu0 0.0
  %814 = vmatprep.subr.mxu0 0.0
  %815 = vmatpush1.xpose.msra.mxu0 0.0
  %816 = vmatprep.subr.mxu0 0.0
  %817 = vmatpush1.xpose.msra.mxu0 0.0
  %818 = vmatprep.subr.mxu0 0.0
  %819 = vmatpush1.xpose.msra.mxu0 0.0
  %820 = vmatprep.subr.mxu0 0.0
  %821 = vmatpush1.xpose.msra.mxu0 0.0
  %822 = vmatprep.subr.mxu0 0.0
  %823 = vmatpush1.xpose.msra.mxu0 0.0
  %824 = vmatprep.subr.mxu0 0.0
  %825 = vmatpush1.xpose.msra.mxu0 0.0
  %826 = vmatprep.subr.mxu0 0.0
  %827 = vmatpush1.xpose.msra.mxu0 0.0
  %828 = vmatprep.mubr.f32.mxu0 0.0
  %829 = vmatmul.mubr.f32.gmra.mrb[0].mxu0 %v742
  %v830 = vpop.f32.mrb[0].mxu0
  %v831 = vadd.f32 0.0, %v830
  %v832 = vpop.f32.mrb[0].mxu0
  %833 = vdwg.mxu0
  %v835 = vrot.slane %v831, 4
  %v837 = vsel %vm362, %v738, %v835
  %v838 = vmul.f32 %v837, 14.285714
  %839 = vst [vmem:[%s14] sm:$0xff] %v838
  // Predicated region
  $region50: #{albef_forward.2} parent=0 // pred_check
    _
  $region51: #{albef_forward.2} parent=0 // pred_check_branch
    %841 = sbr.rel (0) target = $region53
  $region52: #{albef_forward.2} parent=0 // pred_region
    _
  $region53: #{albef_forward.2} parent=0 // pred_fallthru
    _
  // Predicated region
  $region54: #{albef_forward.2} parent=0 // pred_check
    _
  $region55: #{albef_forward.2} parent=0 // pred_check_branch
    %843 = sbr.rel (0) target = $region57
  $region56: #{albef_forward.2} parent=0 // pred_region
    _
  $region57: #{albef_forward.2} parent=0 // pred_fallthru
    _
  // Predicated region
  $region58: #{albef_forward.2} parent=0 // pred_check
    _
  $region59: #{albef_forward.2} parent=0 // pred_check_branch
    %845 = sbr.rel (0) target = $region61
  $region60: #{albef_forward.2} parent=0 // pred_region
    _
  $region61: #{albef_forward.2} parent=0 // pred_fallthru
    _
  // Predicated region
  $region62: #{albef_forward.2} parent=0 // pred_check
    _
  $region63: #{albef_forward.2} parent=0 // pred_check_branch
    %847 = sbr.rel (0) target = $region65
  $region64: #{albef_forward.2} parent=0 // pred_region
    _
  $region65: #{albef_forward.2} parent=0 // pred_fallthru
    _
  // Predicated region
  $region66: #{albef_forward.2} parent=0 // pred_check
    _
  $region67: #{albef_forward.2} parent=0 // pred_check_branch
    %849 = sbr.rel (0) target = $region69
  $region68: #{albef_forward.2} parent=0 // pred_region
    _
  $region69: #{albef_forward.2} parent=0 // pred_fallthru
    _
  // Predicated region
  $region70: #{albef_forward.2} parent=0 // pred_check
    _
  $region71: #{albef_forward.2} parent=0 // pred_check_branch
    %851 = sbr.rel (0) target = $region73
  $region72: #{albef_forward.2} parent=0 // pred_region
    _
  $region73: #{albef_forward.2} parent=0 // pred_fallthru
    _
  // Predicated region
  $region74: #{albef_forward.2} parent=0 // pred_check
    _
  $region75: #{albef_forward.2} parent=0 // pred_check_branch
    %853 = sbr.rel (0) target = $region77
  $region76: #{albef_forward.2} parent=0 // pred_region
    _
  $region77: #{albef_forward.2} parent=0 // pred_fallthru
    _
  // Predicated region
  $region78: #{albef_forward.2} parent=0 // pred_check
    _
  $region79: #{albef_forward.2} parent=0 // pred_check_branch
    %855 = sbr.rel (0) target = $region81
  $region80: #{albef_forward.2} parent=0 // pred_region
    _
  $region81: #{albef_forward.2} parent=0 // pred_fallthru
    _
  // Predicated region
  $region82: #{albef_forward.2} parent=0 // pred_check
    _
  $region83: #{albef_forward.2} parent=0 // pred_check_branch
    %857 = sbr.rel (0) target = $region85
  $region84: #{albef_forward.2} parent=0 // pred_region
    _
  $region85: #{albef_forward.2} parent=0 // pred_fallthru
    _
  // Predicated region
  $region86: #{albef_forward.2} parent=0 // pred_check
    _
  $region87: #{albef_forward.2} parent=0 // pred_check_branch
    %859 = sbr.rel (0) target = $region89
  $region88: #{albef_forward.2} parent=0 // pred_region
    _
  $region89: #{albef_forward.2} parent=0 // pred_fallthru
    _

</llo_original>
